<compile_context>
chip_gen: v5e
topology: v5e:2x2
jax: 0.10.0
libtpu: 0.0.40
codegen_flags: <defaults>
</compile_context>

<pallas_src>
import jax
import jax.numpy as jnp
from jax.experimental import pallas as pl
from jax.experimental.pallas import tpu as pltpu

EPS = 1e-12  # epsilon from softmax_mask


def aoa_kernel(demb_ref, qemb_ref, dmask_ref, qmask_ref, dids_ref, cand_ref,
               w_ref, b_ref, s_ref, pb_ref):
    Bt, N, E = demb_ref.shape
    Q = qemb_ref.shape[1]
    H = w_ref.shape[1]

    w = w_ref[...]                                   # (E, H)  bf16, resident
    b = b_ref[...]                                   # (1, H)  f32,  resident

    # ---- Encoder stand-in: two MXU matmuls against the resident W ----------
    # (no in-kernel concat; reshapes only merge leading dims -> free views)
    de = demb_ref[...].reshape(Bt * N, E)            # bf16 (Bt*N, E)
    qe = qemb_ref[...].reshape(Bt * Q, E)            # bf16 (Bt*Q, E)
    dout = jnp.dot(de, w, preferred_element_type=jnp.float32) + b
    qout = jnp.dot(qe, w, preferred_element_type=jnp.float32) + b
    dout = dout.astype(jnp.bfloat16).reshape(Bt, N, H)   # bf16 MXU operands
    qout = qout.astype(jnp.bfloat16).reshape(Bt, Q, H)

    # ---- M^T = (Bt, Q, N): document axis N on lanes (lane-dense hot path) ---
    M = jnp.einsum('bqh,bnh->bqn', qout, dout,
                   preferred_element_type=jnp.float32)       # f32 acc

    dmask = dmask_ref[...]                           # (Bt, 1, N) f32
    qmask = qmask_ref[...]                           # (Bt, Q, 1) f32
    Mmask = qmask * dmask                            # (Bt, Q, N)
    # docs_len == number of unmasked doc tokens (identical to the torch input);
    # clamp to 1 so padded batch rows don't produce inf/nan (their outputs are 0
    # anyway and get sliced off in the wrapper).
    dlen = jnp.maximum(jnp.sum(dmask, axis=2, keepdims=True), 1.0)   # (Bt,1,1)

    # ---- single exp pass; both softmaxes share it (shift invariance) --------
    shift = jnp.max(jnp.max(M, axis=2, keepdims=True), axis=1, keepdims=True)
    expM = jnp.exp(M - shift) * Mmask                # (Bt, Q, N)  one EUP pass

    # alpha = softmax_mask(M, M_mask, axis=1) in torch layout == over N (lanes)
    alpha = expM * pl.reciprocal(
        jnp.sum(expM, axis=2, keepdims=True) + EPS, approx=True)
    # beta = softmax_mask(M, M_mask, axis=2) in torch layout == over Q (sublanes)
    beta = expM * pl.reciprocal(
        jnp.sum(expM, axis=1, keepdims=True) + EPS, approx=True)

    # average_beta = sum_n beta / docs_len  -> (Bt, Q, 1)
    avg_beta = jnp.sum(beta, axis=2, keepdims=True) * pl.reciprocal(dlen, approx=True)

    # s = bmm(alpha, average_beta^T) -> (Bt, 1, N)  (already lane-dense)
    s_row = jnp.sum(alpha * avg_beta, axis=1, keepdims=True)
    s_ref[...] = s_row

    # ---- candidate pointer sums on the MXU ----------------------------------
    # ptr[b, c, n] = (cand[b, c] == doc_id[b, n]); pb[b, c] = sum_n s[b, n] * ptr
    ptr = jnp.where(cand_ref[...] == dids_ref[...], 1.0, 0.0).astype(jnp.bfloat16)
    pb_ref[...] = jnp.einsum('bxn,bcn->bxc', s_row.astype(jnp.bfloat16), ptr,
                             preferred_element_type=jnp.float32)


def _vmem_bytes_per_batch_elem(N, Q, E, H, Cpad):
    """Rough VMEM footprint of one batch element (padded tile layouts)."""
    dbl = 2  # double-buffered pipeline copies
    ins = dbl * (N * E * 2          # docs_emb   bf16
                 + Q * E * 2        # querys_emb bf16
                 + 8 * N * 4        # doc_mask   (1,N) f32, sublane-padded to 8
                 + Q * 128 * 4      # query_mask (Q,1) f32, lane-padded to 128
                 + 8 * N * 4        # docs_ids   (1,N) i32
                 + Cpad * 128 * 4)  # candidates (Cpad,1) i32, lane-padded
    outs = dbl * (8 * N * 4 + 8 * Cpad * 4)          # s, pb
    enc = (N + Q) * H * (4 + 2)                       # f32 projections + bf16 copies
    attn = 6 * Q * N * 4                              # M, expM, alpha, beta, Mmask + slack
    ptr = Cpad * N * 2 + 2 * N                        # bf16 pointer matrix + bf16 s
    return ins + outs + enc + attn + ptr


def aoa_forward(docs_emb, querys_emb, doc_mask, query_mask, docs_ids,
                cand_plus_ans, w_enc, b_enc, *, block_b=8,
                vmem_budget_bytes=24 << 20):
    """docs_emb (B,N,E) bf16, querys_emb (B,Q,E) bf16, doc_mask (B,1,N) f32,
    query_mask (B,Q,1) f32, docs_ids (B,1,N) i32, cand_plus_ans (B,Cpad,1) i32,
    w_enc (E,H) bf16, b_enc (1,H) f32  ->  s (B,1,N) f32, pb (B,1,Cpad) f32."""
    B, N, E = docs_emb.shape
    Q = querys_emb.shape[1]
    H = w_enc.shape[1]
    Cpad = cand_plus_ans.shape[1]

    # ---- block size from a VMEM budget (v7x-safe); keep >=4 grid steps ------
    bt = max(1, min(block_b, B))
    if B >= 4:
        bt = min(bt, max(1, B // 4))            # >=4 steps -> >=2 per TC on v7x
    per_elem = _vmem_bytes_per_batch_elem(N, Q, E, H, Cpad)
    resident = 2 * (E * H * 2 + 8 * H * 4)      # encoder W/b (constant index_map)
    while bt > 1 and resident + bt * per_elem > vmem_budget_bytes:
        bt -= 1

    # Pad the batch so bt divides it (don't shrink bt to an odd divisor).
    Bp = -(-B // bt) * bt

    def pad_b(x):
        if Bp == B:
            return x
        pad = [(0, Bp - B)] + [(0, 0)] * (x.ndim - 1)
        return jnp.pad(x, pad)

    docs_emb = pad_b(docs_emb)
    querys_emb = pad_b(querys_emb)
    doc_mask = pad_b(doc_mask)
    query_mask = pad_b(query_mask)
    docs_ids = pad_b(docs_ids)
    cand_plus_ans = pad_b(cand_plus_ans)

    grid = (Bp // bt,)
    vmem_limit = int(min(max(resident + bt * per_elem + (8 << 20), 24 << 20),
                         60 << 20))

    out_shape = (
        jax.ShapeDtypeStruct((Bp, 1, N), jnp.float32),     # s  (lane-dense)
        jax.ShapeDtypeStruct((Bp, 1, Cpad), jnp.float32),  # pb (cands + answer)
    )
    grid_spec = pltpu.PrefetchScalarGridSpec(
        num_scalar_prefetch=0,
        grid=grid,
        in_specs=[
            pl.BlockSpec((bt, N, E), lambda i: (i, 0, 0)),      # docs_emb
            pl.BlockSpec((bt, Q, E), lambda i: (i, 0, 0)),      # querys_emb
            pl.BlockSpec((bt, 1, N), lambda i: (i, 0, 0)),      # doc_mask (lane-dense)
            pl.BlockSpec((bt, Q, 1), lambda i: (i, 0, 0)),      # query_mask
            pl.BlockSpec((bt, 1, N), lambda i: (i, 0, 0)),      # docs_ids (lane-dense)
            pl.BlockSpec((bt, Cpad, 1), lambda i: (i, 0, 0)),   # candidates + answer
            pl.BlockSpec((E, H), lambda i: (0, 0)),             # encoder W (resident)
            pl.BlockSpec((1, H), lambda i: (0, 0)),             # encoder b (resident)
        ],
        out_specs=[
            pl.BlockSpec((bt, 1, N), lambda i: (i, 0, 0)),
            pl.BlockSpec((bt, 1, Cpad), lambda i: (i, 0, 0)),
        ],
    )
    s, pb = pl.pallas_call(
        aoa_kernel,
        out_shape=out_shape,
        grid_spec=grid_spec,
        compiler_params=pltpu.CompilerParams(
            dimension_semantics=("parallel",),
            vmem_limit_bytes=vmem_limit),
    )(docs_emb, querys_emb, doc_mask, query_mask, docs_ids,
      cand_plus_ans, w_enc, b_enc)
    return s[:B], pb[:B]


if __name__ == "__main__":
    # small but lane-friendly demo shapes (N and Cpad multiples of 128)
    B, N, Q, E, H, V, C = 8, 128, 16, 32, 32, 50, 4
    PAD = 0
    Cpad = 128

    key = jax.random.PRNGKey(0)
    k_emb, k_w, k_doc, k_qry = jax.random.split(key, 4)

    # --- deterministic parameters (synthetic, no checkpoint), stored in bf16 ---
    emb_table = jax.random.uniform(k_emb, (V, E), jnp.float32, -0.05, 0.05)
    emb_table = emb_table.astype(jnp.bfloat16).at[PAD].set(0.0)   # padding_idx=PAD
    w_enc = jax.nn.initializers.orthogonal()(k_w, (E, H), jnp.float32).astype(jnp.bfloat16)
    b_enc = jnp.zeros((1, H), jnp.float32)

    # --- deterministic inputs ---
    docs_len = jnp.array([128, 97, 80, 113, 64, 50, 128, 77], dtype=jnp.int32)
    querys_len = jnp.array([16, 12, 9, 14, 7, 16, 11, 13], dtype=jnp.int32)

    docs_tokens = jax.random.randint(k_doc, (B, N), 1, V, dtype=jnp.int32)
    querys_tokens = jax.random.randint(k_qry, (B, Q), 1, V, dtype=jnp.int32)

    doc_mask = (jnp.arange(N)[None, :] < docs_len[:, None]).astype(jnp.float32)
    query_mask = (jnp.arange(Q)[None, :] < querys_len[:, None]).astype(jnp.float32)

    docs_input = jnp.where(doc_mask > 0, docs_tokens, PAD)
    querys_input = jnp.where(query_mask > 0, querys_tokens, PAD)

    candidates = docs_input[:, :C]      # pick candidates from the document
    answers = docs_input[:, 1:2]        # gold answer = second document token

    # glue: embedding lookup (sort/unsort from sort_batch cancels; skipped)
    docs_emb = jnp.take(emb_table, docs_input, axis=0)       # bf16 (B,N,E)
    querys_emb = jnp.take(emb_table, querys_input, axis=0)   # bf16 (B,Q,E)

    # glue: pad candidates to a lane-dense 128-wide slab; column C = gold answer,
    # remaining columns = -1 sentinel (never matches a token id).
    cand_plus_ans = jnp.full((B, Cpad), -1, dtype=jnp.int32)
    cand_plus_ans = cand_plus_ans.at[:, :C].set(candidates)
    cand_plus_ans = cand_plus_ans.at[:, C].set(answers[:, 0])

    s, pb = aoa_forward(
        docs_emb, querys_emb,
        doc_mask.reshape(B, 1, N),
        query_mask.reshape(B, Q, 1),
        docs_input.reshape(B, 1, N).astype(jnp.int32),
        cand_plus_ans.reshape(B, Cpad, 1),
        w_enc, b_enc, block_b=8)

    # glue: back to torch layout / final argmax
    s_torch = s.reshape(B, N, 1)                # == torch `s`
    pb_c = pb[:, 0, :C]                         # per-candidate pointer sums
    probs = pb[:, 0, C]                         # gold answer probability
    max_loc = jnp.argmax(pb_c, axis=1)
    pred_answers = jnp.take_along_axis(candidates, max_loc[:, None], axis=1)[:, 0]

    jax.block_until_ready((s_torch, pb_c, probs, pred_answers))
    print("KERNEL_OK")
</pallas_src>

<mosaic_0001>
module attributes {stable_mosaic.version = 11 : i64} {
  func.func @aoa_kernel(%arg0: i32, %arg1: memref<2x128x32xbf16, #tpu.memory_space<vmem>>, %arg2: memref<2x16x32xbf16, #tpu.memory_space<vmem>>, %arg3: memref<2x1x128xf32, #tpu.memory_space<vmem>>, %arg4: memref<2x16x1xf32, #tpu.memory_space<vmem>>, %arg5: memref<2x1x128xi32, #tpu.memory_space<vmem>>, %arg6: memref<2x128x1xi32, #tpu.memory_space<vmem>>, %arg7: memref<32x32xbf16, #tpu.memory_space<vmem>>, %arg8: memref<1x32xf32, #tpu.memory_space<vmem>>, %arg9: memref<2x1x128xf32, #tpu.memory_space<vmem>>, %arg10: memref<2x1x128xf32, #tpu.memory_space<vmem>>) attributes {dimension_semantics = [#tpu.dimension_semantics<parallel>], iteration_bounds = array<i64: 4>, scalar_prefetch = 0 : i64, scratch_operands = 0 : i64, tpu.core_type = #tpu.core_type<tc>, window_params = [{transform_indices = @transform_0, window_bounds = array<i64: 2, 128, 32>}, {transform_indices = @transform_1, window_bounds = array<i64: 2, 16, 32>}, {transform_indices = @transform_2, window_bounds = array<i64: 2, 1, 128>}, {transform_indices = @transform_3, window_bounds = array<i64: 2, 16, 1>}, {transform_indices = @transform_4, window_bounds = array<i64: 2, 1, 128>}, {transform_indices = @transform_5, window_bounds = array<i64: 2, 128, 1>}, {pipeline_mode = #tpu.pipeline_mode<synchronous>, transform_indices = @transform_6, window_bounds = array<i64: 32, 32>}, {pipeline_mode = #tpu.pipeline_mode<synchronous>, transform_indices = @transform_7, window_bounds = array<i64: 1, 32>}, {transform_indices = @transform_8, window_bounds = array<i64: 2, 1, 128>}, {transform_indices = @transform_9, window_bounds = array<i64: 2, 1, 128>}]} {
    %c0 = arith.constant 0 : index
    %c0_0 = arith.constant 0 : index
    %0 = vector.load %arg7[%c0, %c0_0] : memref<32x32xbf16, #tpu.memory_space<vmem>>, vector<32x32xbf16>
    %c0_1 = arith.constant 0 : index
    %c0_2 = arith.constant 0 : index
    %1 = vector.load %arg8[%c0_1, %c0_2] : memref<1x32xf32, #tpu.memory_space<vmem>>, vector<1x32xf32>
    %c0_3 = arith.constant 0 : index
    %c0_4 = arith.constant 0 : index
    %c0_5 = arith.constant 0 : index
    %2 = vector.load %arg1[%c0_3, %c0_4, %c0_5] : memref<2x128x32xbf16, #tpu.memory_space<vmem>>, vector<2x128x32xbf16>
    %3 = vector.shape_cast %2 : vector<2x128x32xbf16> to vector<256x32xbf16>
    %c0_6 = arith.constant 0 : index
    %c0_7 = arith.constant 0 : index
    %c0_8 = arith.constant 0 : index
    %4 = vector.load %arg2[%c0_6, %c0_7, %c0_8] : memref<2x16x32xbf16, #tpu.memory_space<vmem>>, vector<2x16x32xbf16>
    %5 = vector.shape_cast %4 : vector<2x16x32xbf16> to vector<32x32xbf16>
    %cst = arith.constant dense<0.000000e+00> : vector<256x32xf32>
    %6 = tpu.matmul %3, %0, %cst {dimension_numbers = #tpu.dot_dimension_numbers<[1], [0], [0], [1], [0, 0, 1, 1], [], []>} : vector<256x32xbf16>, vector<32x32xbf16>, vector<256x32xf32> -> vector<256x32xf32>
    %7 = vector.broadcast %1 : vector<1x32xf32> to vector<256x32xf32>
    %8 = arith.addf %6, %7 : vector<256x32xf32>
    %cst_9 = arith.constant dense<0.000000e+00> : vector<32x32xf32>
    %9 = tpu.matmul %5, %0, %cst_9 {dimension_numbers = #tpu.dot_dimension_numbers<[1], [0], [0], [1], [0, 0, 1, 1], [], []>} : vector<32x32xbf16>, vector<32x32xbf16>, vector<32x32xf32> -> vector<32x32xf32>
    %10 = vector.broadcast %1 : vector<1x32xf32> to vector<32x32xf32>
    %11 = arith.addf %9, %10 : vector<32x32xf32>
    %12 = arith.truncf %8 : vector<256x32xf32> to vector<256x32xbf16>
    %13 = vector.shape_cast %12 : vector<256x32xbf16> to vector<2x128x32xbf16>
    %14 = arith.truncf %11 : vector<32x32xf32> to vector<32x32xbf16>
    %15 = vector.shape_cast %14 : vector<32x32xbf16> to vector<2x16x32xbf16>
    "tpu.trace_start"() <{level = 10 : i32, message = "bqh,bnh->bqn"}> : () -> ()
    %cst_10 = arith.constant dense<0.000000e+00> : vector<2x16x128xf32>
    %16 = tpu.matmul %15, %13, %cst_10 {dimension_numbers = #tpu.dot_dimension_numbers<[2], [2], [1], [1], [0, 0, 0, 1, 1, 1], [0], [0]>} : vector<2x16x32xbf16>, vector<2x128x32xbf16>, vector<2x16x128xf32> -> vector<2x16x128xf32>
    "tpu.trace_stop"() : () -> ()
    %c0_11 = arith.constant 0 : index
    %c0_12 = arith.constant 0 : index
    %c0_13 = arith.constant 0 : index
    %17 = vector.load %arg3[%c0_11, %c0_12, %c0_13] : memref<2x1x128xf32, #tpu.memory_space<vmem>>, vector<2x1x128xf32>
    %c0_14 = arith.constant 0 : index
    %c0_15 = arith.constant 0 : index
    %c0_16 = arith.constant 0 : index
    %18 = vector.load %arg4[%c0_14, %c0_15, %c0_16] : memref<2x16x1xf32, #tpu.memory_space<vmem>>, vector<2x16x1xf32>
    %19 = vector.broadcast %18 : vector<2x16x1xf32> to vector<2x16x128xf32>
    %20 = vector.broadcast %17 : vector<2x1x128xf32> to vector<2x16x128xf32>
    %21 = arith.mulf %19, %20 : vector<2x16x128xf32>
    %cst_17 = arith.constant dense<0.000000e+00> : vector<2x1xf32>
    %22 = vector.multi_reduction <add>, %17, %cst_17 [2] : vector<2x1x128xf32> to vector<2x1xf32>
    %23 = vector.shape_cast %22 : vector<2x1xf32> to vector<2x1x1xf32>
    %cst_18 = arith.constant 1.000000e+00 : f32
    %24 = vector.broadcast %cst_18 : f32 to vector<2x1x1xf32>
    %25 = arith.maximumf %23, %24 : vector<2x1x1xf32>
    %cst_19 = arith.constant dense<0xFF800000> : vector<2x16xf32>
    %26 = vector.multi_reduction <maximumf>, %16, %cst_19 [2] : vector<2x16x128xf32> to vector<2x16xf32>
    %27 = vector.shape_cast %26 : vector<2x16xf32> to vector<2x16x1xf32>
    %cst_20 = arith.constant dense<0xFF800000> : vector<2x1xf32>
    %28 = vector.multi_reduction <maximumf>, %27, %cst_20 [1] : vector<2x16x1xf32> to vector<2x1xf32>
    %29 = vector.shape_cast %28 : vector<2x1xf32> to vector<2x1x1xf32>
    %30 = vector.broadcast %29 : vector<2x1x1xf32> to vector<2x16x128xf32>
    %31 = arith.subf %16, %30 : vector<2x16x128xf32>
    %32 = math.exp %31 : vector<2x16x128xf32>
    %33 = arith.mulf %32, %21 : vector<2x16x128xf32>
    %cst_21 = arith.constant dense<0.000000e+00> : vector<2x16xf32>
    %34 = vector.multi_reduction <add>, %33, %cst_21 [2] : vector<2x16x128xf32> to vector<2x16xf32>
    %35 = vector.shape_cast %34 : vector<2x16xf32> to vector<2x16x1xf32>
    %cst_22 = arith.constant 9.99999996E-13 : f32
    %36 = vector.broadcast %cst_22 : f32 to vector<2x16x1xf32>
    %37 = arith.addf %35, %36 : vector<2x16x1xf32>
    %38 = tpu.reciprocal %37 {approx = true} : vector<2x16x1xf32> -> vector<2x16x1xf32>
    %39 = vector.broadcast %38 : vector<2x16x1xf32> to vector<2x16x128xf32>
    %40 = arith.mulf %33, %39 : vector<2x16x128xf32>
    %cst_23 = arith.constant dense<0.000000e+00> : vector<2x128xf32>
    %41 = vector.multi_reduction <add>, %33, %cst_23 [1] : vector<2x16x128xf32> to vector<2x128xf32>
    %42 = vector.shape_cast %41 : vector<2x128xf32> to vector<2x1x128xf32>
    %cst_24 = arith.constant 9.99999996E-13 : f32
    %43 = vector.broadcast %cst_24 : f32 to vector<2x1x128xf32>
    %44 = arith.addf %42, %43 : vector<2x1x128xf32>
    %45 = tpu.reciprocal %44 {approx = true} : vector<2x1x128xf32> -> vector<2x1x128xf32>
    %46 = vector.broadcast %45 : vector<2x1x128xf32> to vector<2x16x128xf32>
    %47 = arith.mulf %33, %46 : vector<2x16x128xf32>
    %cst_25 = arith.constant dense<0.000000e+00> : vector<2x16xf32>
    %48 = vector.multi_reduction <add>, %47, %cst_25 [2] : vector<2x16x128xf32> to vector<2x16xf32>
    %49 = vector.shape_cast %48 : vector<2x16xf32> to vector<2x16x1xf32>
    %50 = tpu.reciprocal %25 {approx = true} : vector<2x1x1xf32> -> vector<2x1x1xf32>
    %51 = vector.broadcast %50 : vector<2x1x1xf32> to vector<2x16x1xf32>
    %52 = arith.mulf %49, %51 : vector<2x16x1xf32>
    %53 = vector.broadcast %52 : vector<2x16x1xf32> to vector<2x16x128xf32>
    %54 = arith.mulf %40, %53 : vector<2x16x128xf32>
    %cst_26 = arith.constant dense<0.000000e+00> : vector<2x128xf32>
    %55 = vector.multi_reduction <add>, %54, %cst_26 [1] : vector<2x16x128xf32> to vector<2x128xf32>
    %56 = vector.shape_cast %55 : vector<2x128xf32> to vector<2x1x128xf32>
    %c0_27 = arith.constant 0 : index
    %c0_28 = arith.constant 0 : index
    %c0_29 = arith.constant 0 : index
    %57 = vector.load %arg9[%c0_27, %c0_28, %c0_29] : memref<2x1x128xf32, #tpu.memory_space<vmem>>, vector<2x1x128xf32>
    tpu.vector_store %arg9[%c0_27, %c0_28, %c0_29], %56 {strides = array<i32>} : memref<2x1x128xf32, #tpu.memory_space<vmem>>, vector<2x1x128xf32>,
    %c0_30 = arith.constant 0 : index
    %c0_31 = arith.constant 0 : index
    %c0_32 = arith.constant 0 : index
    %58 = vector.load %arg6[%c0_30, %c0_31, %c0_32] : memref<2x128x1xi32, #tpu.memory_space<vmem>>, vector<2x128x1xi32>
    %c0_33 = arith.constant 0 : index
    %c0_34 = arith.constant 0 : index
    %c0_35 = arith.constant 0 : index
    %59 = vector.load %arg5[%c0_33, %c0_34, %c0_35] : memref<2x1x128xi32, #tpu.memory_space<vmem>>, vector<2x1x128xi32>
    %60 = vector.broadcast %58 : vector<2x128x1xi32> to vector<2x128x128xi32>
    %61 = vector.broadcast %59 : vector<2x1x128xi32> to vector<2x128x128xi32>
    %62 = arith.cmpi eq, %60, %61 : vector<2x128x128xi32>
    %cst_36 = arith.constant 1.000000e+00 : f32
    %cst_37 = arith.constant 0.000000e+00 : f32
    %63 = vector.broadcast %cst_36 : f32 to vector<2x128x128xf32>
    %64 = vector.broadcast %cst_37 : f32 to vector<2x128x128xf32>
    %65 = arith.select %62, %63, %64 : vector<2x128x128xi1>, vector<2x128x128xf32>
    %66 = arith.truncf %65 : vector<2x128x128xf32> to vector<2x128x128xbf16>
    %67 = arith.truncf %56 : vector<2x1x128xf32> to vector<2x1x128xbf16>
    "tpu.trace_start"() <{level = 10 : i32, message = "bxn,bcn->bxc"}> : () -> ()
    %cst_38 = arith.constant dense<0.000000e+00> : vector<2x1x128xf32>
    %68 = tpu.matmul %67, %66, %cst_38 {dimension_numbers = #tpu.dot_dimension_numbers<[2], [2], [1], [1], [0, 0, 0, 1, 1, 1], [0], [0]>} : vector<2x1x128xbf16>, vector<2x128x128xbf16>, vector<2x1x128xf32> -> vector<2x1x128xf32>
    "tpu.trace_stop"() : () -> ()
    %c0_39 = arith.constant 0 : index
    %c0_40 = arith.constant 0 : index
    %c0_41 = arith.constant 0 : index
    %69 = vector.load %arg10[%c0_39, %c0_40, %c0_41] : memref<2x1x128xf32, #tpu.memory_space<vmem>>, vector<2x1x128xf32>
    tpu.vector_store %arg10[%c0_39, %c0_40, %c0_41], %68 {strides = array<i32>} : memref<2x1x128xf32, #tpu.memory_space<vmem>>, vector<2x1x128xf32>,
    return
  }
  func.func @transform_0(%arg0: i32) -> (i32, i32, i32) {
    %c0_i32 = arith.constant 0 : i32
    %c0_i32_0 = arith.constant 0 : i32
    %c0_i32_1 = arith.constant 0 : i32
    return %arg0, %c0_i32, %c0_i32_0 : i32, i32, i32
  }
  func.func @transform_1(%arg0: i32) -> (i32, i32, i32) {
    %c0_i32 = arith.constant 0 : i32
    %c0_i32_0 = arith.constant 0 : i32
    %c0_i32_1 = arith.constant 0 : i32
    return %arg0, %c0_i32, %c0_i32_0 : i32, i32, i32
  }
  func.func @transform_2(%arg0: i32) -> (i32, i32, i32) {
    %c0_i32 = arith.constant 0 : i32
    %c0_i32_0 = arith.constant 0 : i32
    %c0_i32_1 = arith.constant 0 : i32
    return %arg0, %c0_i32, %c0_i32_0 : i32, i32, i32
  }
  func.func @transform_3(%arg0: i32) -> (i32, i32, i32) {
    %c0_i32 = arith.constant 0 : i32
    %c0_i32_0 = arith.constant 0 : i32
    %c0_i32_1 = arith.constant 0 : i32
    return %arg0, %c0_i32, %c0_i32_0 : i32, i32, i32
  }
  func.func @transform_4(%arg0: i32) -> (i32, i32, i32) {
    %c0_i32 = arith.constant 0 : i32
    %c0_i32_0 = arith.constant 0 : i32
    %c0_i32_1 = arith.constant 0 : i32
    return %arg0, %c0_i32, %c0_i32_0 : i32, i32, i32
  }
  func.func @transform_5(%arg0: i32) -> (i32, i32, i32) {
    %c0_i32 = arith.constant 0 : i32
    %c0_i32_0 = arith.constant 0 : i32
    %c0_i32_1 = arith.constant 0 : i32
    return %arg0, %c0_i32, %c0_i32_0 : i32, i32, i32
  }
  func.func @transform_6(%arg0: i32) -> (i32, i32) {
    %c0_i32 = arith.constant 0 : i32
    %c0_i32_0 = arith.constant 0 : i32
    %c0_i32_1 = arith.constant 0 : i32
    return %c0_i32, %c0_i32_0 : i32, i32
  }
  func.func @transform_7(%arg0: i32) -> (i32, i32) {
    %c0_i32 = arith.constant 0 : i32
    %c0_i32_0 = arith.constant 0 : i32
    %c0_i32_1 = arith.constant 0 : i32
    return %c0_i32, %c0_i32_0 : i32, i32
  }
  func.func @transform_8(%arg0: i32) -> (i32, i32, i32) {
    %c0_i32 = arith.constant 0 : i32
    %c0_i32_0 = arith.constant 0 : i32
    %c0_i32_1 = arith.constant 0 : i32
    return %arg0, %c0_i32, %c0_i32_0 : i32, i32, i32
  }
  func.func @transform_9(%arg0: i32) -> (i32, i32, i32) {
    %c0_i32 = arith.constant 0 : i32
    %c0_i32_0 = arith.constant 0 : i32
    %c0_i32_1 = arith.constant 0 : i32
    return %arg0, %c0_i32, %c0_i32_0 : i32, i32, i32
  }
}

</mosaic_0001>

<llo_original>
// kernel: tpu_custom_call.1
$region0: #{tpu_custom_call.1}
  #allocation0 [shape = 'u32[]', space=smem, size = 0x4, offset = 0x4, fixed_abs, tag = 'smem constant byte address 0x4 - core index']
  #allocation1 [shape = 'u32[72,128]{1,0:T(1,128)}', space=vmem, size = 0x9000, scoped, tag = 'internal scratch']
  %s0 = inlined_call_operand.vmem [shape: bf16[8,128,32], index: 0, kind: input, shape index: {}]
  %s1 = inlined_call_operand.vmem [shape: bf16[8,16,32], index: 1, kind: input, shape index: {}]
  %s2 = inlined_call_operand.vmem [shape: f32[8,1,128], index: 2, kind: input, shape index: {}]
  %s3 = inlined_call_operand.vmem [shape: f32[8,16,1], index: 3, kind: input, shape index: {}]
  %s4 = inlined_call_operand.vmem [shape: s32[8,1,128], index: 4, kind: input, shape index: {}]
  %s5 = inlined_call_operand.vmem [shape: s32[8,128,1], index: 5, kind: input, shape index: {}]
  %s6 = inlined_call_operand.vmem [shape: bf16[32,32], index: 6, kind: input, shape index: {}]
  %s7 = inlined_call_operand.vmem [shape: f32[1,32], index: 7, kind: input, shape index: {}]
  %s8 = inlined_call_operand.hbm [shape: f32[8,1,128], index: 8, kind: output, shape index: {0}]
  %s9 = inlined_call_operand.hbm [shape: f32[8,1,128], index: 9, kind: output, shape index: {1}]
  %10 = xla_tuple %s8, %s9
  %s11 = sld [smem:[#allocation0]]
  $region73: #{tpu_custom_call.1} parent=0
    _
  %s13 = ssub.s32 1, %s11
  %s14 = scalar_select 0, %s13, %s11
  $region1: #{tpu_custom_call.1} parent=0
    #allocation2 [shape = 'u8[2048]{0}', space=vmem, size = 0x800, scoped, tag = 'output window, operand 0']
    #allocation3 [shape = 's32[2]{0}', space=sflag, size = 0x8, scoped, tag = 'scoped memory for tpu_custom_call.1']
    #allocation4 [shape = 'u8[2048]{0}', space=vmem, size = 0x800, scoped, tag = 'output window, operand 1']
    #allocation5 [shape = 's32[2]{0}', space=sflag, size = 0x8, scoped, tag = 'scoped memory for tpu_custom_call.1']
    %15 = vsyncpa [#allocation3], 0
    %s16 = scalar_lea.sflag [#allocation3], 1
    %17 = vsyncpa %s16, 0
    %18 = vsyncpa [#allocation5], 0
    %s19 = scalar_lea.sflag [#allocation5], 1
    %20 = vsyncpa %s19, 0
    loop: start=0, step=1, limit=6
    $region2: #{tpu_custom_call.1} parent=1 // loop_pre_header
      _
    $region3: #{tpu_custom_call.1} parent=1 // loop_header
      %s22 = sphi 0, %s26
      %p23 = scmp.ge.s32.totalorder %s22, 6
      %s32 = sphi 0, %s34
      %s35 = sphi 0, %s32
      %s36 = sphi 0, %s35
      %s52 = sphi 0, %s36
      %s58 = sphi 0, %s60
      %s61 = sphi 0, %s58
      %s62 = sphi 0, %s61
      %s78 = sphi 0, %s62
      %s84 = sphi 0, %s86
      %s87 = sphi 0, %s84
      %s88 = sphi 0, %s87
      %s104 = sphi 0, %s88
      %s110 = sphi 0, %s112
      %s113 = sphi 0, %s110
      %s114 = sphi 0, %s113
      %s130 = sphi 0, %s114
      %s136 = sphi 0, %s138
      %s139 = sphi 0, %s136
      %s140 = sphi 0, %s139
      %s156 = sphi 0, %s140
      %s162 = sphi 0, %s164
      %s165 = sphi 0, %s162
      %s166 = sphi 0, %s165
      %s182 = sphi 0, %s166
      %s186 = sphi 0, %s186
      %s188 = sphi 0, %s186
      %s189 = sphi 0, %s188
      %s203 = sphi 0, %s189
      %s207 = sphi 0, %s207
      %s209 = sphi 0, %s207
      %s210 = sphi 0, %s209
      %s224 = sphi 0, %s210
      %s230 = sphi 0, %s232
      %s233 = sphi 0, %s230
      %s234 = sphi 0, %s233
      %s250 = sphi 0, %s234
      %s256 = sphi 0, %s258
      %s259 = sphi 0, %s256
      %s260 = sphi 0, %s259
      %s276 = sphi 0, %s260
    $region4: #{tpu_custom_call.1} parent=1 // loop_header_branch
      %25 = sbr.rel (%p23) target = $region8
    $region5: #{tpu_custom_call.1} parent=1 // loop_body
      %s27 = ssub.s32 %s22, 1
      %s28 = ssub.s32 %s22, 2
      %s29 = sadd.s32 %s22, 1
      %s30 = ssub.s32 %s22, %s29
      %p31 = scmp.eq.s32.totalorder %s30, 0
      %s33 = sadd.s32 %s32, 1
      %s34 = scalar_select %p31, %s32, %s33
      %p37 = pneg %p31
      %p38 = scmp.eq.s32.totalorder %s22, 3
      %p39 = por %p37, %p38
      %p40 = scmp.ne.s32.totalorder %s32, %s35
      %p41 = scmp.eq.s32.totalorder %s22, 0
      %p42 = por %p40, %p41
      %p43 = scmp.ne.s32.totalorder %s32, %s35
      %p44 = scmp.eq.s32.totalorder %s27, 3
      %p45 = por %p43, %p44
      %p46 = scmp.ne.s32.totalorder %s35, %s36
      %p47 = scmp.eq.s32.totalorder %s27, 0
      %p48 = por %p46, %p47
      %p49 = scmp.ne.s32.totalorder %s35, %s36
      %p50 = scmp.eq.s32.totalorder %s28, 3
      %p51 = por %p49, %p50
      %p53 = scmp.ne.s32.totalorder %s36, %s52
      %p54 = scmp.eq.s32.totalorder %s28, 0
      %p55 = por %p53, %p54
      %s56 = ssub.s32 %s22, %s29
      %p57 = scmp.eq.s32.totalorder %s56, 0
      %s59 = sadd.s32 %s58, 1
      %s60 = scalar_select %p57, %s58, %s59
      %p63 = pneg %p57
      %p64 = scmp.eq.s32.totalorder %s22, 3
      %p65 = por %p63, %p64
      %p66 = scmp.ne.s32.totalorder %s58, %s61
      %p67 = scmp.eq.s32.totalorder %s22, 0
      %p68 = por %p66, %p67
      %p69 = scmp.ne.s32.totalorder %s58, %s61
      %p70 = scmp.eq.s32.totalorder %s27, 3
      %p71 = por %p69, %p70
      %p72 = scmp.ne.s32.totalorder %s61, %s62
      %p73 = scmp.eq.s32.totalorder %s27, 0
      %p74 = por %p72, %p73
      %p75 = scmp.ne.s32.totalorder %s61, %s62
      %p76 = scmp.eq.s32.totalorder %s28, 3
      %p77 = por %p75, %p76
      %p79 = scmp.ne.s32.totalorder %s62, %s78
      %p80 = scmp.eq.s32.totalorder %s28, 0
      %p81 = por %p79, %p80
      %s82 = ssub.s32 %s22, %s29
      %p83 = scmp.eq.s32.totalorder %s82, 0
      %s85 = sadd.s32 %s84, 1
      %s86 = scalar_select %p83, %s84, %s85
      %p89 = pneg %p83
      %p90 = scmp.eq.s32.totalorder %s22, 3
      %p91 = por %p89, %p90
      %p92 = scmp.ne.s32.totalorder %s84, %s87
      %p93 = scmp.eq.s32.totalorder %s22, 0
      %p94 = por %p92, %p93
      %p95 = scmp.ne.s32.totalorder %s84, %s87
      %p96 = scmp.eq.s32.totalorder %s27, 3
      %p97 = por %p95, %p96
      %p98 = scmp.ne.s32.totalorder %s87, %s88
      %p99 = scmp.eq.s32.totalorder %s27, 0
      %p100 = por %p98, %p99
      %p101 = scmp.ne.s32.totalorder %s87, %s88
      %p102 = scmp.eq.s32.totalorder %s28, 3
      %p103 = por %p101, %p102
      %p105 = scmp.ne.s32.totalorder %s88, %s104
      %p106 = scmp.eq.s32.totalorder %s28, 0
      %p107 = por %p105, %p106
      %s108 = ssub.s32 %s22, %s29
      %p109 = scmp.eq.s32.totalorder %s108, 0
      %s111 = sadd.s32 %s110, 1
      %s112 = scalar_select %p109, %s110, %s111
      %p115 = pneg %p109
      %p116 = scmp.eq.s32.totalorder %s22, 3
      %p117 = por %p115, %p116
      %p118 = scmp.ne.s32.totalorder %s110, %s113
      %p119 = scmp.eq.s32.totalorder %s22, 0
      %p120 = por %p118, %p119
      %p121 = scmp.ne.s32.totalorder %s110, %s113
      %p122 = scmp.eq.s32.totalorder %s27, 3
      %p123 = por %p121, %p122
      %p124 = scmp.ne.s32.totalorder %s113, %s114
      %p125 = scmp.eq.s32.totalorder %s27, 0
      %p126 = por %p124, %p125
      %p127 = scmp.ne.s32.totalorder %s113, %s114
      %p128 = scmp.eq.s32.totalorder %s28, 3
      %p129 = por %p127, %p128
      %p131 = scmp.ne.s32.totalorder %s114, %s130
      %p132 = scmp.eq.s32.totalorder %s28, 0
      %p133 = por %p131, %p132
      %s134 = ssub.s32 %s22, %s29
      %p135 = scmp.eq.s32.totalorder %s134, 0
      %s137 = sadd.s32 %s136, 1
      %s138 = scalar_select %p135, %s136, %s137
      %p141 = pneg %p135
      %p142 = scmp.eq.s32.totalorder %s22, 3
      %p143 = por %p141, %p142
      %p144 = scmp.ne.s32.totalorder %s136, %s139
      %p145 = scmp.eq.s32.totalorder %s22, 0
      %p146 = por %p144, %p145
      %p147 = scmp.ne.s32.totalorder %s136, %s139
      %p148 = scmp.eq.s32.totalorder %s27, 3
      %p149 = por %p147, %p148
      %p150 = scmp.ne.s32.totalorder %s139, %s140
      %p151 = scmp.eq.s32.totalorder %s27, 0
      %p152 = por %p150, %p151
      %p153 = scmp.ne.s32.totalorder %s139, %s140
      %p154 = scmp.eq.s32.totalorder %s28, 3
      %p155 = por %p153, %p154
      %p157 = scmp.ne.s32.totalorder %s140, %s156
      %p158 = scmp.eq.s32.totalorder %s28, 0
      %p159 = por %p157, %p158
      %s160 = ssub.s32 %s22, %s29
      %p161 = scmp.eq.s32.totalorder %s160, 0
      %s163 = sadd.s32 %s162, 1
      %s164 = scalar_select %p161, %s162, %s163
      %p167 = pneg %p161
      %p168 = scmp.eq.s32.totalorder %s22, 3
      %p169 = por %p167, %p168
      %p170 = scmp.ne.s32.totalorder %s162, %s165
      %p171 = scmp.eq.s32.totalorder %s22, 0
      %p172 = por %p170, %p171
      %p173 = scmp.ne.s32.totalorder %s162, %s165
      %p174 = scmp.eq.s32.totalorder %s27, 3
      %p175 = por %p173, %p174
      %p176 = scmp.ne.s32.totalorder %s165, %s166
      %p177 = scmp.eq.s32.totalorder %s27, 0
      %p178 = por %p176, %p177
      %p179 = scmp.ne.s32.totalorder %s165, %s166
      %p180 = scmp.eq.s32.totalorder %s28, 3
      %p181 = por %p179, %p180
      %p183 = scmp.ne.s32.totalorder %s166, %s182
      %p184 = scmp.eq.s32.totalorder %s28, 0
      %p185 = por %p183, %p184
      %s187 = sadd.s32 %s186, 1
      %p190 = scmp.eq.s32.totalorder %s22, 3
      %p191 = scmp.ne.s32.totalorder %s186, %s188
      %p192 = scmp.eq.s32.totalorder %s22, 0
      %p193 = por %p191, %p192
      %p194 = scmp.ne.s32.totalorder %s186, %s188
      %p195 = scmp.eq.s32.totalorder %s27, 3
      %p196 = por %p194, %p195
      %p197 = scmp.ne.s32.totalorder %s188, %s189
      %p198 = scmp.eq.s32.totalorder %s27, 0
      %p199 = por %p197, %p198
      %p200 = scmp.ne.s32.totalorder %s188, %s189
      %p201 = scmp.eq.s32.totalorder %s28, 3
      %p202 = por %p200, %p201
      %p204 = scmp.ne.s32.totalorder %s189, %s203
      %p205 = scmp.eq.s32.totalorder %s28, 0
      %p206 = por %p204, %p205
      %s208 = sadd.s32 %s207, 1
      %p211 = scmp.eq.s32.totalorder %s22, 3
      %p212 = scmp.ne.s32.totalorder %s207, %s209
      %p213 = scmp.eq.s32.totalorder %s22, 0
      %p214 = por %p212, %p213
      %p215 = scmp.ne.s32.totalorder %s207, %s209
      %p216 = scmp.eq.s32.totalorder %s27, 3
      %p217 = por %p215, %p216
      %p218 = scmp.ne.s32.totalorder %s209, %s210
      %p219 = scmp.eq.s32.totalorder %s27, 0
      %p220 = por %p218, %p219
      %p221 = scmp.ne.s32.totalorder %s209, %s210
      %p222 = scmp.eq.s32.totalorder %s28, 3
      %p223 = por %p221, %p222
      %p225 = scmp.ne.s32.totalorder %s210, %s224
      %p226 = scmp.eq.s32.totalorder %s28, 0
      %p227 = por %p225, %p226
      %s228 = ssub.s32 %s22, %s29
      %p229 = scmp.eq.s32.totalorder %s228, 0
      %s231 = sadd.s32 %s230, 1
      %s232 = scalar_select %p229, %s230, %s231
      %p235 = pneg %p229
      %p236 = scmp.eq.s32.totalorder %s22, 3
      %p237 = por %p235, %p236
      %p238 = scmp.ne.s32.totalorder %s230, %s233
      %p239 = scmp.eq.s32.totalorder %s22, 0
      %p240 = por %p238, %p239
      %p241 = scmp.ne.s32.totalorder %s230, %s233
      %p242 = scmp.eq.s32.totalorder %s27, 3
      %p243 = por %p241, %p242
      %p244 = scmp.ne.s32.totalorder %s233, %s234
      %p245 = scmp.eq.s32.totalorder %s27, 0
      %p246 = por %p244, %p245
      %p247 = scmp.ne.s32.totalorder %s233, %s234
      %p248 = scmp.eq.s32.totalorder %s28, 3
      %p249 = por %p247, %p248
      %p251 = scmp.ne.s32.totalorder %s234, %s250
      %p252 = scmp.eq.s32.totalorder %s28, 0
      %p253 = por %p251, %p252
      %s254 = ssub.s32 %s22, %s29
      %p255 = scmp.eq.s32.totalorder %s254, 0
      %s257 = sadd.s32 %s256, 1
      %s258 = scalar_select %p255, %s256, %s257
      %p261 = pneg %p255
      %p262 = scmp.eq.s32.totalorder %s22, 3
      %p263 = por %p261, %p262
      %p264 = scmp.ne.s32.totalorder %s256, %s259
      %p265 = scmp.eq.s32.totalorder %s22, 0
      %p266 = por %p264, %p265
      %p267 = scmp.ne.s32.totalorder %s256, %s259
      %p268 = scmp.eq.s32.totalorder %s27, 3
      %p269 = por %p267, %p268
      %p270 = scmp.ne.s32.totalorder %s259, %s260
      %p271 = scmp.eq.s32.totalorder %s27, 0
      %p272 = por %p270, %p271
      %p273 = scmp.ne.s32.totalorder %s259, %s260
      %p274 = scmp.eq.s32.totalorder %s28, 3
      %p275 = por %p273, %p274
      %p277 = scmp.ne.s32.totalorder %s260, %s276
      %p278 = scmp.eq.s32.totalorder %s28, 0
      %p279 = por %p277, %p278
      %p280 = scmp.le.s32.totalorder 1, %s22
      %p281 = scmp.lt.s32.totalorder %s22, 5
      %p282 = pnand %p280, %p281
      %p283 = pneg %p282
      // Predicated region
      $region9: #{tpu_custom_call.1} parent=5 // pred_check
        _
      $region10: #{tpu_custom_call.1} parent=5 // pred_check_branch
        %285 = sbr.rel (%p282) target = $region12
      $region11: #{tpu_custom_call.1} parent=5 // pred_region
        %s286 = ssub.s32 %s22, 1
        // Predicated region
        $region13: #{tpu_custom_call.1} parent=11 // pred_check
          %p287 = pneg %p199
        $region14: #{tpu_custom_call.1} parent=11 // pred_check_branch
          %289 = sbr.rel (%p287) target = $region16
        $region15: #{tpu_custom_call.1} parent=11 // pred_region
          _
        $region16: #{tpu_custom_call.1} parent=11 // pred_fallthru
          _
        // Predicated region
        $region17: #{tpu_custom_call.1} parent=11 // pred_check
          %p290 = pneg %p220
        $region18: #{tpu_custom_call.1} parent=11 // pred_check_branch
          %292 = sbr.rel (%p290) target = $region20
        $region19: #{tpu_custom_call.1} parent=11 // pred_region
          _
        $region20: #{tpu_custom_call.1} parent=11 // pred_fallthru
          _
      $region12: #{tpu_custom_call.1} parent=5 // pred_fallthru
        _
      %p293 = scmp.lt.s32.totalorder %s22, 4
      // Predicated region
      $region21: #{tpu_custom_call.1} parent=5 // pred_check
        %p294 = pneg %p293
      $region22: #{tpu_custom_call.1} parent=5 // pred_check_branch
        %296 = sbr.rel (%p294) target = $region24
      $region23: #{tpu_custom_call.1} parent=5 // pred_region
        // Predicated region
        $region25: #{tpu_custom_call.1} parent=23 // pred_check
          %p297 = pneg %p42
        $region26: #{tpu_custom_call.1} parent=23 // pred_check_branch
          %299 = sbr.rel (%p297) target = $region28
        $region27: #{tpu_custom_call.1} parent=23 // pred_region
          %s300 = smul.u32 2, %s22
          %p301 = scmp.lt.s32.totalorder %s300, 7
          %s302 = scalar_select %p301, %s300, 7
          %s303 = smul.addr %s302, 16
          %s304 = smul.addr %s303, 4
          %s305 = scalar_lea.vmem %s0, %s304
          %s306 = smul.u32 2, %s22
        $region28: #{tpu_custom_call.1} parent=23 // pred_fallthru
          _
        // Predicated region
        $region29: #{tpu_custom_call.1} parent=23 // pred_check
          %p307 = pneg %p68
        $region30: #{tpu_custom_call.1} parent=23 // pred_check_branch
          %309 = sbr.rel (%p307) target = $region32
        $region31: #{tpu_custom_call.1} parent=23 // pred_region
          %s310 = smul.u32 2, %s22
          %p311 = scmp.lt.s32.totalorder %s310, 7
          %s312 = scalar_select %p311, %s310, 7
          %s313 = smul.addr %s312, 2
          %s314 = smul.addr %s313, 4
          %s315 = scalar_lea.vmem %s1, %s314
          %s316 = smul.u32 2, %s22
        $region32: #{tpu_custom_call.1} parent=23 // pred_fallthru
          _
        // Predicated region
        $region33: #{tpu_custom_call.1} parent=23 // pred_check
          %p317 = pneg %p94
        $region34: #{tpu_custom_call.1} parent=23 // pred_check_branch
          %319 = sbr.rel (%p317) target = $region36
        $region35: #{tpu_custom_call.1} parent=23 // pred_region
          %s320 = smul.u32 2, %s22
          %p321 = scmp.lt.s32.totalorder %s320, 7
          %s322 = scalar_select %p321, %s320, 7
          %s323 = scalar_lea.vmem %s2, %s322
          %s324 = smul.u32 2, %s22
        $region36: #{tpu_custom_call.1} parent=23 // pred_fallthru
          _
        // Predicated region
        $region37: #{tpu_custom_call.1} parent=23 // pred_check
          %p325 = pneg %p120
        $region38: #{tpu_custom_call.1} parent=23 // pred_check_branch
          %327 = sbr.rel (%p325) target = $region40
        $region39: #{tpu_custom_call.1} parent=23 // pred_region
          %s328 = smul.u32 2, %s22
          %p329 = scmp.lt.s32.totalorder %s328, 7
          %s330 = scalar_select %p329, %s328, 7
          %s331 = smul.addr %s330, 2
          %s332 = smul.addr %s331, 8
          %s333 = scalar_lea.vmem %s3, %s332
          %s334 = smul.u32 2, %s22
        $region40: #{tpu_custom_call.1} parent=23 // pred_fallthru
          _
        // Predicated region
        $region41: #{tpu_custom_call.1} parent=23 // pred_check
          %p335 = pneg %p146
        $region42: #{tpu_custom_call.1} parent=23 // pred_check_branch
          %337 = sbr.rel (%p335) target = $region44
        $region43: #{tpu_custom_call.1} parent=23 // pred_region
          %s338 = smul.u32 2, %s22
          %p339 = scmp.lt.s32.totalorder %s338, 7
          %s340 = scalar_select %p339, %s338, 7
          %s341 = scalar_lea.vmem %s4, %s340
          %s342 = smul.u32 2, %s22
        $region44: #{tpu_custom_call.1} parent=23 // pred_fallthru
          _
        // Predicated region
        $region45: #{tpu_custom_call.1} parent=23 // pred_check
          %p343 = pneg %p172
        $region46: #{tpu_custom_call.1} parent=23 // pred_check_branch
          %345 = sbr.rel (%p343) target = $region48
        $region47: #{tpu_custom_call.1} parent=23 // pred_region
          %s346 = smul.u32 2, %s22
          %p347 = scmp.lt.s32.totalorder %s346, 7
          %s348 = scalar_select %p347, %s346, 7
          %s349 = smul.addr %s348, 16
          %s350 = smul.addr %s349, 8
          %s351 = scalar_lea.vmem %s5, %s350
          %s352 = smul.u32 2, %s22
        $region48: #{tpu_custom_call.1} parent=23 // pred_fallthru
          _
      $region24: #{tpu_custom_call.1} parent=5 // pred_fallthru
        _
      %p353 = scmp.le.s32.totalorder 1, %s22
      %p354 = scmp.lt.s32.totalorder %s22, 5
      %p355 = pnand %p353, %p354
      %p356 = pneg %p355
      // Predicated region
      $region49: #{tpu_custom_call.1} parent=5 // pred_check
        _
      $region50: #{tpu_custom_call.1} parent=5 // pred_check_branch
        %358 = sbr.rel (%p355) target = $region52
      $region51: #{tpu_custom_call.1} parent=5 // pred_region
        %s359 = ssub.s32 %s22, 1
        %s360 = smul.u32 2, %s27
        %p361 = scmp.lt.s32.totalorder %s360, 7
        %s362 = scalar_select %p361, %s360, 7
        %s363 = smul.addr %s362, 16
        %s364 = smul.addr %s363, 4
        %s365 = scalar_lea.vmem %s0, %s364
        %p366 = pneg %p48
        %p367 = pneg %p45
        %s368 = smul.u32 2, %s27
        %p369 = scmp.lt.s32.totalorder %s368, 7
        %s370 = scalar_select %p369, %s368, 7
        %s371 = smul.addr %s370, 2
        %s372 = smul.addr %s371, 4
        %s373 = scalar_lea.vmem %s1, %s372
        %p374 = pneg %p74
        %p375 = pneg %p71
        %s376 = smul.u32 2, %s27
        %p377 = scmp.lt.s32.totalorder %s376, 7
        %s378 = scalar_select %p377, %s376, 7
        %s379 = scalar_lea.vmem %s2, %s378
        %p380 = pneg %p100
        %p381 = pneg %p97
        %s382 = smul.u32 2, %s27
        %p383 = scmp.lt.s32.totalorder %s382, 7
        %s384 = scalar_select %p383, %s382, 7
        %s385 = smul.addr %s384, 2
        %s386 = smul.addr %s385, 8
        %s387 = scalar_lea.vmem %s3, %s386
        %p388 = pneg %p126
        %p389 = pneg %p123
        %s390 = smul.u32 2, %s27
        %p391 = scmp.lt.s32.totalorder %s390, 7
        %s392 = scalar_select %p391, %s390, 7
        %s393 = scalar_lea.vmem %s4, %s392
        %p394 = pneg %p152
        %p395 = pneg %p149
        %s396 = smul.u32 2, %s27
        %p397 = scmp.lt.s32.totalorder %s396, 7
        %s398 = scalar_select %p397, %s396, 7
        %s399 = smul.addr %s398, 16
        %s400 = smul.addr %s399, 8
        %s401 = scalar_lea.vmem %s5, %s400
        %p402 = pneg %p178
        %p403 = pneg %p175
        %p404 = pneg %p199
        %p405 = pneg %p196
        %p406 = pneg %p220
        %p407 = pneg %p217
        %p408 = pneg %p246
        %p409 = pneg %p243
        %s410 = sand.u32 %s233, 1
        %s411 = scalar_lea.sflag [#allocation3], %s410
        %s412 = sand.u32 %s233, 1
        %s413 = smul.addr %s412, 2
        %s414 = scalar_lea.vmem [#allocation2], %s413
        %p415 = pneg %p272
        %p416 = pneg %p269
        %s417 = sand.u32 %s259, 1
        %s418 = scalar_lea.sflag [#allocation5], %s417
        %s419 = sand.u32 %s259, 1
        %s420 = smul.addr %s419, 2
        %s421 = scalar_lea.vmem [#allocation4], %s420
        %s422 = smul.u32 2, %s27
        %p423 = scmp.lt.s32.totalorder %s422, 7
        %s424 = scalar_select %p423, %s422, 7
        %s425 = smul.addr %s424, 16
        %s426 = smul.addr %s425, 4
        %s427 = scalar_lea.vmem %s0, %s426
        %s428 = smul.u32 2, %s27
        %s429 = smul.u32 2, %s27
        %p430 = scmp.lt.s32.totalorder %s429, 7
        %s431 = scalar_select %p430, %s429, 7
        %s432 = smul.addr %s431, 2
        %s433 = smul.addr %s432, 4
        %s434 = scalar_lea.vmem %s1, %s433
        %s435 = smul.u32 2, %s27
        %s436 = smul.u32 2, %s27
        %p437 = scmp.lt.s32.totalorder %s436, 7
        %s438 = scalar_select %p437, %s436, 7
        %s439 = scalar_lea.vmem %s2, %s438
        %s440 = smul.u32 2, %s27
        %s441 = smul.u32 2, %s27
        %p442 = scmp.lt.s32.totalorder %s441, 7
        %s443 = scalar_select %p442, %s441, 7
        %s444 = smul.addr %s443, 2
        %s445 = smul.addr %s444, 8
        %s446 = scalar_lea.vmem %s3, %s445
        %s447 = smul.u32 2, %s27
        %s448 = smul.u32 2, %s27
        %p449 = scmp.lt.s32.totalorder %s448, 7
        %s450 = scalar_select %p449, %s448, 7
        %s451 = scalar_lea.vmem %s4, %s450
        %s452 = smul.u32 2, %s27
        %s453 = smul.u32 2, %s27
        %p454 = scmp.lt.s32.totalorder %s453, 7
        %s455 = scalar_select %p454, %s453, 7
        %s456 = smul.addr %s455, 16
        %s457 = smul.addr %s456, 8
        %s458 = scalar_lea.vmem %s5, %s457
        %s459 = smul.u32 2, %s27
        %s460 = smul.u32 2, %s27
        %s461 = smul.u32 2, %s27
        %v463 = vld [vmem:[%s6] sm:$0xf]
        %v464 = vld [vmem:[%s6 + $0x4] sm:$0xf]
        %v465 = vld [vmem:[%s6 + $0x8] sm:$0xf]
        %v466 = vld [vmem:[%s6 + $0xc] sm:$0xf]
        %v467 = vld [vmem:[%s7] sm:$0x1]
        %v468 = vld [vmem:[%s427] sm:$0xf]
        %v469 = vld [vmem:[%s427 + $0x4] sm:$0xf]
        %v470 = vld [vmem:[%s427 + $0x8] sm:$0xf]
        %v471 = vld [vmem:[%s427 + $0xc] sm:$0xf]
        %v472 = vld [vmem:[%s427 + $0x10] sm:$0xf]
        %v473 = vld [vmem:[%s427 + $0x14] sm:$0xf]
        %v474 = vld [vmem:[%s427 + $0x18] sm:$0xf]
        %v475 = vld [vmem:[%s427 + $0x1c] sm:$0xf]
        %v476 = vld [vmem:[%s427 + $0x20] sm:$0xf]
        %v477 = vld [vmem:[%s427 + $0x24] sm:$0xf]
        %v478 = vld [vmem:[%s427 + $0x28] sm:$0xf]
        %v479 = vld [vmem:[%s427 + $0x2c] sm:$0xf]
        %v480 = vld [vmem:[%s427 + $0x30] sm:$0xf]
        %v481 = vld [vmem:[%s427 + $0x34] sm:$0xf]
        %v482 = vld [vmem:[%s427 + $0x38] sm:$0xf]
        %v483 = vld [vmem:[%s427 + $0x3c] sm:$0xf]
        %v484 = vld [vmem:[%s427 + $0x40] sm:$0xf]
        %v485 = vld [vmem:[%s427 + $0x44] sm:$0xf]
        %v486 = vld [vmem:[%s427 + $0x48] sm:$0xf]
        %v487 = vld [vmem:[%s427 + $0x4c] sm:$0xf]
        %v488 = vld [vmem:[%s427 + $0x50] sm:$0xf]
        %v489 = vld [vmem:[%s427 + $0x54] sm:$0xf]
        %v490 = vld [vmem:[%s427 + $0x58] sm:$0xf]
        %v491 = vld [vmem:[%s427 + $0x5c] sm:$0xf]
        %v492 = vld [vmem:[%s427 + $0x60] sm:$0xf]
        %v493 = vld [vmem:[%s427 + $0x64] sm:$0xf]
        %v494 = vld [vmem:[%s427 + $0x68] sm:$0xf]
        %v495 = vld [vmem:[%s427 + $0x6c] sm:$0xf]
        %v496 = vld [vmem:[%s427 + $0x70] sm:$0xf]
        %v497 = vld [vmem:[%s427 + $0x74] sm:$0xf]
        %v498 = vld [vmem:[%s427 + $0x78] sm:$0xf]
        %v499 = vld [vmem:[%s427 + $0x7c] sm:$0xf]
        %v500 = vld [vmem:[%s434] sm:$0xf]
        %v501 = vld [vmem:[%s434 + $0x4] sm:$0xf]
        %v502 = vld [vmem:[%s434 + $0x8] sm:$0xf]
        %v503 = vld [vmem:[%s434 + $0xc] sm:$0xf]
        %v505 = vperm.slane %v467, 0
        %v539 = vunpack.c.l.b16 %v468
        %v540 = vunpack.c.l.b16 %v469
        %v541 = vunpack.c.l.b16 %v470
        %v542 = vunpack.c.l.b16 %v471
        %v543 = vunpack.c.l.b16 %v472
        %v544 = vunpack.c.l.b16 %v473
        %v545 = vunpack.c.l.b16 %v474
        %v546 = vunpack.c.l.b16 %v475
        %v547 = vunpack.c.l.b16 %v476
        %v548 = vunpack.c.l.b16 %v477
        %v549 = vunpack.c.l.b16 %v478
        %v550 = vunpack.c.l.b16 %v479
        %v551 = vunpack.c.l.b16 %v480
        %v552 = vunpack.c.l.b16 %v481
        %v553 = vunpack.c.l.b16 %v482
        %v554 = vunpack.c.l.b16 %v483
        %v555 = vunpack.c.l.b16 %v484
        %v556 = vunpack.c.l.b16 %v485
        %v557 = vunpack.c.l.b16 %v486
        %v558 = vunpack.c.l.b16 %v487
        %v559 = vunpack.c.l.b16 %v488
        %v560 = vunpack.c.l.b16 %v489
        %v561 = vunpack.c.l.b16 %v490
        %v562 = vunpack.c.l.b16 %v491
        %v563 = vunpack.c.l.b16 %v492
        %v564 = vunpack.c.l.b16 %v493
        %v565 = vunpack.c.l.b16 %v494
        %v566 = vunpack.c.l.b16 %v495
        %v567 = vunpack.c.l.b16 %v496
        %v568 = vunpack.c.l.b16 %v497
        %v569 = vunpack.c.l.b16 %v498
        %v570 = vunpack.c.l.b16 %v499
        %v571 = vpack.c.b16 %v540, %v539
        %v572 = vpack.c.b16 %v542, %v541
        %v573 = vpack.c.b16 %v544, %v543
        %v574 = vpack.c.b16 %v546, %v545
        %v575 = vpack.c.b16 %v548, %v547
        %v576 = vpack.c.b16 %v550, %v549
        %v577 = vpack.c.b16 %v552, %v551
        %v578 = vpack.c.b16 %v554, %v553
        %v579 = vpack.c.b16 %v556, %v555
        %v580 = vpack.c.b16 %v558, %v557
        %v581 = vpack.c.b16 %v560, %v559
        %v582 = vpack.c.b16 %v562, %v561
        %v583 = vpack.c.b16 %v564, %v563
        %v584 = vpack.c.b16 %v566, %v565
        %v585 = vpack.c.b16 %v568, %v567
        %v586 = vpack.c.b16 %v570, %v569
        %v591 = vunpack.c.l.b16 %v463
        %v592 = vunpack.c.l.b16 %v464
        %v593 = vunpack.c.l.b16 %v465
        %v594 = vunpack.c.l.b16 %v466
        %v595 = vpack.c.b16 %v592, %v591
        %v596 = vpack.c.b16 %v594, %v593
        %vm599 = vcmask 261120
        %v601 = vsel %vm599, %v571, 0
        %v604 = vsel %vm599, %v572, 0
        %v607 = vsel %vm599, %v573, 0
        %v610 = vsel %vm599, %v574, 0
        %v613 = vsel %vm599, %v575, 0
        %v616 = vsel %vm599, %v576, 0
        %v619 = vsel %vm599, %v577, 0
        %v622 = vsel %vm599, %v578, 0
        %v625 = vsel %vm599, %v579, 0
        %v628 = vsel %vm599, %v580, 0
        %v631 = vsel %vm599, %v581, 0
        %v634 = vsel %vm599, %v582, 0
        %v637 = vsel %vm599, %v583, 0
        %v640 = vsel %vm599, %v584, 0
        %v643 = vsel %vm599, %v585, 0
        %v646 = vsel %vm599, %v586, 0
        %648 = vmatpush.bf16.msra.mxu0 0
        %649 = vmatpush.bf16.msra.mxu0 0
        %650 = vmatpush.bf16.msra.mxu0 0
        %651 = vmatpush.bf16.msra.mxu0 0
        %652 = vmatpush.bf16.msra.mxu0 0
        %653 = vmatpush.bf16.msra.mxu0 0
        %654 = vmatpush.bf16.msra.mxu0 %v596
        %655 = vmatpush.bf16.msra.mxu0 %v595
        %656 = vmatmul.bf16.gmra.mxu0 %v601
        %v657 = vpop.f32.mrf.mxu0
        %v658 = vadd.f32 %v505, %v657
        %v659 = vpop.f32.mrf.mxu0
        %v660 = vadd.f32 %v505, %v659
        %661 = vmatmul.bf16.gmra.mxu0 %v604
        %v662 = vpop.f32.mrf.mxu0
        %v663 = vadd.f32 %v505, %v662
        %v664 = vpop.f32.mrf.mxu0
        %v665 = vadd.f32 %v505, %v664
        %666 = vmatmul.bf16.gmra.mxu0 %v607
        %v667 = vpop.f32.mrf.mxu0
        %v668 = vadd.f32 %v505, %v667
        %v669 = vpop.f32.mrf.mxu0
        %v670 = vadd.f32 %v505, %v669
        %671 = vmatmul.bf16.gmra.mxu0 %v610
        %v672 = vpop.f32.mrf.mxu0
        %v673 = vadd.f32 %v505, %v672
        %v674 = vpop.f32.mrf.mxu0
        %v675 = vadd.f32 %v505, %v674
        %676 = vmatmul.bf16.gmra.mxu0 %v613
        %v677 = vpop.f32.mrf.mxu0
        %v678 = vadd.f32 %v505, %v677
        %v679 = vpop.f32.mrf.mxu0
        %v680 = vadd.f32 %v505, %v679
        %681 = vmatmul.bf16.gmra.mxu0 %v616
        %v682 = vpop.f32.mrf.mxu0
        %v683 = vadd.f32 %v505, %v682
        %v684 = vpop.f32.mrf.mxu0
        %v685 = vadd.f32 %v505, %v684
        %686 = vmatmul.bf16.gmra.mxu0 %v619
        %v687 = vpop.f32.mrf.mxu0
        %v688 = vadd.f32 %v505, %v687
        %v689 = vpop.f32.mrf.mxu0
        %v690 = vadd.f32 %v505, %v689
        %691 = vmatmul.bf16.gmra.mxu0 %v622
        %v692 = vpop.f32.mrf.mxu0
        %v693 = vadd.f32 %v505, %v692
        %v694 = vpop.f32.mrf.mxu0
        %v695 = vadd.f32 %v505, %v694
        %696 = vmatmul.bf16.gmra.mxu0 %v625
        %v697 = vpop.f32.mrf.mxu0
        %v698 = vadd.f32 %v505, %v697
        %v699 = vpop.f32.mrf.mxu0
        %v700 = vadd.f32 %v505, %v699
        %701 = vmatmul.bf16.gmra.mxu0 %v628
        %v702 = vpop.f32.mrf.mxu0
        %v703 = vadd.f32 %v505, %v702
        %v704 = vpop.f32.mrf.mxu0
        %v705 = vadd.f32 %v505, %v704
        %706 = vmatmul.bf16.gmra.mxu0 %v631
        %v707 = vpop.f32.mrf.mxu0
        %v708 = vadd.f32 %v505, %v707
        %v709 = vpop.f32.mrf.mxu0
        %v710 = vadd.f32 %v505, %v709
        %711 = vmatmul.bf16.gmra.mxu0 %v634
        %v712 = vpop.f32.mrf.mxu0
        %v713 = vadd.f32 %v505, %v712
        %v714 = vpop.f32.mrf.mxu0
        %v715 = vadd.f32 %v505, %v714
        %716 = vmatmul.bf16.gmra.mxu0 %v637
        %v717 = vpop.f32.mrf.mxu0
        %v718 = vadd.f32 %v505, %v717
        %v719 = vpop.f32.mrf.mxu0
        %v720 = vadd.f32 %v505, %v719
        %721 = vmatmul.bf16.gmra.mxu0 %v640
        %v722 = vpop.f32.mrf.mxu0
        %v723 = vadd.f32 %v505, %v722
        %v724 = vpop.f32.mrf.mxu0
        %v725 = vadd.f32 %v505, %v724
        %726 = vmatmul.bf16.gmra.mxu0 %v643
        %v727 = vpop.f32.mrf.mxu0
        %v728 = vadd.f32 %v505, %v727
        %v729 = vpop.f32.mrf.mxu0
        %v730 = vadd.f32 %v505, %v729
        %731 = vmatmul.bf16.gmra.mxu0 %v646
        %v732 = vpop.f32.mrf.mxu0
        %v733 = vadd.f32 %v505, %v732
        %v734 = vpop.f32.mrf.mxu0
        %v735 = vadd.f32 %v505, %v734
        %736 = vdwg.mxu0
        %v741 = vunpack.c.l.b16 %v500
        %v742 = vunpack.c.l.b16 %v501
        %v743 = vunpack.c.l.b16 %v502
        %v744 = vunpack.c.l.b16 %v503
        %v745 = vpack.c.b16 %v742, %v741
        %v746 = vpack.c.b16 %v744, %v743
        %v748 = vsel %vm599, %v745, 0
        %v751 = vsel %vm599, %v746, 0
        %753 = vmatpush.bf16.msra.mxu0 0
        %754 = vmatpush.bf16.msra.mxu0 0
        %755 = vmatpush.bf16.msra.mxu0 0
        %756 = vmatpush.bf16.msra.mxu0 0
        %757 = vmatpush.bf16.msra.mxu0 0
        %758 = vmatpush.bf16.msra.mxu0 0
        %759 = vmatpush.bf16.msra.mxu0 %v596
        %760 = vmatpush.bf16.msra.mxu0 %v595
        %761 = vmatmul.bf16.gmra.mxu0 %v748
        %v762 = vpop.f32.mrf.mxu0
        %v763 = vadd.f32 %v505, %v762
        %v764 = vpop.f32.mrf.mxu0
        %v765 = vadd.f32 %v505, %v764
        %766 = vmatmul.bf16.gmra.mxu0 %v751
        %v767 = vpop.f32.mrf.mxu0
        %v768 = vadd.f32 %v505, %v767
        %v769 = vpop.f32.mrf.mxu0
        %v770 = vadd.f32 %v505, %v769
        %771 = vdwg.mxu0
        %v772 = vpack.c.bf16 %v658, %v658
        %v773 = vpack.c.bf16 %v660, %v660
        %v774 = vpack.c.bf16 %v663, %v663
        %v775 = vpack.c.bf16 %v665, %v665
        %v776 = vpack.c.bf16 %v668, %v668
        %v777 = vpack.c.bf16 %v670, %v670
        %v778 = vpack.c.bf16 %v673, %v673
        %v779 = vpack.c.bf16 %v675, %v675
        %v780 = vpack.c.bf16 %v678, %v678
        %v781 = vpack.c.bf16 %v680, %v680
        %v782 = vpack.c.bf16 %v683, %v683
        %v783 = vpack.c.bf16 %v685, %v685
        %v784 = vpack.c.bf16 %v688, %v688
        %v785 = vpack.c.bf16 %v690, %v690
        %v786 = vpack.c.bf16 %v693, %v693
        %v787 = vpack.c.bf16 %v695, %v695
        %v788 = vpack.c.bf16 %v698, %v698
        %v789 = vpack.c.bf16 %v700, %v700
        %v790 = vpack.c.bf16 %v703, %v703
        %v791 = vpack.c.bf16 %v705, %v705
        %v792 = vpack.c.bf16 %v708, %v708
        %v793 = vpack.c.bf16 %v710, %v710
        %v794 = vpack.c.bf16 %v713, %v713
        %v795 = vpack.c.bf16 %v715, %v715
        %v796 = vpack.c.bf16 %v718, %v718
        %v797 = vpack.c.bf16 %v720, %v720
        %v798 = vpack.c.bf16 %v723, %v723
        %v799 = vpack.c.bf16 %v725, %v725
        %v800 = vpack.c.bf16 %v728, %v728
        %v801 = vpack.c.bf16 %v730, %v730
        %v802 = vpack.c.bf16 %v733, %v733
        %v803 = vpack.c.bf16 %v735, %v735
        %v804 = vpack.c.bf16 %v763, %v763
        %v805 = vpack.c.bf16 %v765, %v765
        %v806 = vpack.c.bf16 %v768, %v768
        %v807 = vpack.c.bf16 %v770, %v770
        %v810 = vunpack.c.l.b16 %v804
        %v811 = vunpack.c.l.b16 %v805
        %v812 = vpack.c.b16 %v811, %v810
        %v829 = vunpack.c.l.b16 %v772
        %v830 = vunpack.c.l.b16 %v773
        %v831 = vunpack.c.l.b16 %v774
        %v832 = vunpack.c.l.b16 %v775
        %v833 = vunpack.c.l.b16 %v776
        %v834 = vunpack.c.l.b16 %v777
        %v835 = vunpack.c.l.b16 %v778
        %v836 = vunpack.c.l.b16 %v779
        %v837 = vunpack.c.l.b16 %v780
        %v838 = vunpack.c.l.b16 %v781
        %v839 = vunpack.c.l.b16 %v782
        %v840 = vunpack.c.l.b16 %v783
        %v841 = vunpack.c.l.b16 %v784
        %v842 = vunpack.c.l.b16 %v785
        %v843 = vunpack.c.l.b16 %v786
        %v844 = vunpack.c.l.b16 %v787
        %v845 = vpack.c.b16 %v830, %v829
        %v846 = vpack.c.b16 %v832, %v831
        %v847 = vpack.c.b16 %v834, %v833
        %v848 = vpack.c.b16 %v836, %v835
        %v849 = vpack.c.b16 %v838, %v837
        %v850 = vpack.c.b16 %v840, %v839
        %v851 = vpack.c.b16 %v842, %v841
        %v852 = vpack.c.b16 %v844, %v843
        %v854 = vsel %vm599, %v812, 0
        %v857 = vsel %vm599, %v845, 0
        %v860 = vsel %vm599, %v846, 0
        %v863 = vsel %vm599, %v847, 0
        %v866 = vsel %vm599, %v848, 0
        %v869 = vsel %vm599, %v849, 0
        %v872 = vsel %vm599, %v850, 0
        %v875 = vsel %vm599, %v851, 0
        %v878 = vsel %vm599, %v852, 0
        %880 = vmatpush.bf16.xpose.msra.mxu0 %v878
        %881 = vmatpush.bf16.xpose.msra.mxu0 %v875
        %882 = vmatpush.bf16.xpose.msra.mxu0 %v872
        %883 = vmatpush.bf16.xpose.msra.mxu0 %v869
        %884 = vmatpush.bf16.xpose.msra.mxu0 %v866
        %885 = vmatpush.bf16.xpose.msra.mxu0 %v863
        %886 = vmatpush.bf16.xpose.msra.mxu0 %v860
        %887 = vmatpush.bf16.xpose.msra.mxu0 %v857
        %888 = vmatmul.bf16.gmra.mxu0 %v854
        %v889 = vpop.f32.mrf.mxu0
        %v890 = vadd.f32 0.0, %v889
        %v891 = vpop.f32.mrf.mxu0
        %v892 = vadd.f32 0.0, %v891
        %893 = vdwg.mxu0
        %v896 = vunpack.c.l.b16 %v806
        %v897 = vunpack.c.l.b16 %v807
        %v898 = vpack.c.b16 %v897, %v896
        %v915 = vunpack.c.l.b16 %v788
        %v916 = vunpack.c.l.b16 %v789
        %v917 = vunpack.c.l.b16 %v790
        %v918 = vunpack.c.l.b16 %v791
        %v919 = vunpack.c.l.b16 %v792
        %v920 = vunpack.c.l.b16 %v793
        %v921 = vunpack.c.l.b16 %v794
        %v922 = vunpack.c.l.b16 %v795
        %v923 = vunpack.c.l.b16 %v796
        %v924 = vunpack.c.l.b16 %v797
        %v925 = vunpack.c.l.b16 %v798
        %v926 = vunpack.c.l.b16 %v799
        %v927 = vunpack.c.l.b16 %v800
        %v928 = vunpack.c.l.b16 %v801
        %v929 = vunpack.c.l.b16 %v802
        %v930 = vunpack.c.l.b16 %v803
        %v931 = vpack.c.b16 %v916, %v915
        %v932 = vpack.c.b16 %v918, %v917
        %v933 = vpack.c.b16 %v920, %v919
        %v934 = vpack.c.b16 %v922, %v921
        %v935 = vpack.c.b16 %v924, %v923
        %v936 = vpack.c.b16 %v926, %v925
        %v937 = vpack.c.b16 %v928, %v927
        %v938 = vpack.c.b16 %v930, %v929
        %v940 = vsel %vm599, %v898, 0
        %v943 = vsel %vm599, %v931, 0
        %v946 = vsel %vm599, %v932, 0
        %v949 = vsel %vm599, %v933, 0
        %v952 = vsel %vm599, %v934, 0
        %v955 = vsel %vm599, %v935, 0
        %v958 = vsel %vm599, %v936, 0
        %v961 = vsel %vm599, %v937, 0
        %v964 = vsel %vm599, %v938, 0
        %966 = vmatpush.bf16.xpose.msra.mxu0 %v964
        %967 = vmatpush.bf16.xpose.msra.mxu0 %v961
        %968 = vmatpush.bf16.xpose.msra.mxu0 %v958
        %969 = vmatpush.bf16.xpose.msra.mxu0 %v955
        %970 = vmatpush.bf16.xpose.msra.mxu0 %v952
        %971 = vmatpush.bf16.xpose.msra.mxu0 %v949
        %972 = vmatpush.bf16.xpose.msra.mxu0 %v946
        %973 = vmatpush.bf16.xpose.msra.mxu0 %v943
        %974 = vmatmul.bf16.gmra.mxu0 %v940
        %v975 = vpop.f32.mrf.mxu0
        %v976 = vadd.f32 0.0, %v975
        %v977 = vpop.f32.mrf.mxu0
        %v978 = vadd.f32 0.0, %v977
        %979 = vdwg.mxu0
        %v980 = vld [vmem:[%s439] sm:$0x1]
        %v981 = vld [vmem:[%s439 + $0x1] sm:$0x1]
        %v982 = vld [vmem:[%s446] sm:$0xff]
        %v983 = vld [vmem:[%s446 + $0x8] sm:$0xff]
        %v984 = vld [vmem:[%s446 + $0x10] sm:$0xff]
        %v985 = vld [vmem:[%s446 + $0x18] sm:$0xff]
        %987 = vset.pattern.permute.xlu0 0
        %988 = vperm.xlu0 %987, %v982
        %v989 = vpop.permute.xlu0 %988
        %992 = vset.pattern.permute.xlu0 0
        %993 = vperm.xlu0 %992, %v983
        %v994 = vpop.permute.xlu0 %993
        %997 = vset.pattern.permute.xlu0 0
        %998 = vperm.xlu0 %997, %v984
        %v999 = vpop.permute.xlu0 %998
        %1002 = vset.pattern.permute.xlu0 0
        %1003 = vperm.xlu0 %1002, %v985
        %v1004 = vpop.permute.xlu0 %1003
        %v1008 = vperm.slane %v980, 0
        %v1009 = vperm.slane %v981, 0
        %v1012 = vmul.f32 %v989, %v1008
        %v1013 = vmul.f32 %v994, %v1008
        %v1014 = vmul.f32 %v999, %v1009
        %v1015 = vmul.f32 %v1004, %v1009
        %vm1016 = vcmask 1040384
        %v1017 = vsel %vm1016, %v980, 0.0
        %1018 = vadd.xlane.f32.xlu0 %v1017
        %v1019 = vpop.xlane.xlu0 %1018
        %v1020 = vsel %vm1016, %v981, 0.0
        %1021 = vadd.xlane.f32.xlu0 %v1020
        %v1022 = vpop.xlane.xlu0 %1021
        %v1023 = vmax.f32 %v1019, 1.0
        %v1024 = vmax.f32 %v1022, 1.0
        %1025 = vmax.xlane.f32.xlu0 %v890
        %v1026 = vpop.xlane.xlu0 %1025
        %1027 = vmax.xlane.f32.xlu0 %v892
        %v1028 = vpop.xlane.xlu0 %1027
        %1029 = vmax.xlane.f32.xlu0 %v976
        %v1030 = vpop.xlane.xlu0 %1029
        %1031 = vmax.xlane.f32.xlu0 %v978
        %v1032 = vpop.xlane.xlu0 %1031
        %v1033 = vmax.f32 %v1026, %v1028
        %v1034 = vrot.slane %v1033, 4
        %v1035 = vmax.f32 %v1033, %v1034
        %v1036 = vrot.slane %v1035, 2
        %v1037 = vmax.f32 %v1035, %v1036
        %v1038 = vrot.slane %v1037, 1
        %v1039 = vmax.f32 %v1037, %v1038
        %v1040 = vmax.f32 %v1030, %v1032
        %v1041 = vrot.slane %v1040, 4
        %v1042 = vmax.f32 %v1040, %v1041
        %v1043 = vrot.slane %v1042, 2
        %v1044 = vmax.f32 %v1042, %v1043
        %v1045 = vrot.slane %v1044, 1
        %v1046 = vmax.f32 %v1044, %v1045
        %v1047 = vsub.f32 %v890, %v1039
        %v1048 = vsub.f32 %v892, %v1039
        %v1049 = vsub.f32 %v976, %v1046
        %v1050 = vsub.f32 %v978, %v1046
        %v1051 = vmul.f32 %v1047, 1.442695
        %v1052 = vpow.pop %v1051
        %v1053 = vmul.f32 %v1048, 1.442695
        %v1054 = vpow.pop %v1053
        %v1055 = vmul.f32 %v1049, 1.442695
        %v1056 = vpow.pop %v1055
        %v1057 = vmul.f32 %v1050, 1.442695
        %v1058 = vpow.pop %v1057
        %v1059 = vmul.f32 %v1052, %v1012
        %v1060 = vmul.f32 %v1054, %v1013
        %v1061 = vmul.f32 %v1056, %v1014
        %v1062 = vmul.f32 %v1058, %v1015
        %1063 = vadd.xlane.f32.xlu0 %v1059
        %v1064 = vpop.xlane.xlu0 %1063
        %1065 = vadd.xlane.f32.xlu0 %v1060
        %v1066 = vpop.xlane.xlu0 %1065
        %1067 = vadd.xlane.f32.xlu0 %v1061
        %v1068 = vpop.xlane.xlu0 %1067
        %1069 = vadd.xlane.f32.xlu0 %v1062
        %v1070 = vpop.xlane.xlu0 %1069
        %v1071 = vadd.f32 %v1064, 1e-12
        %v1072 = vadd.f32 %v1066, 1e-12
        %v1073 = vadd.f32 %v1068, 1e-12
        %v1074 = vadd.f32 %v1070, 1e-12
        %v1075 = vrcp.pop %v1071
        %v1076 = vrcp.pop %v1072
        %v1077 = vrcp.pop %v1073
        %v1078 = vrcp.pop %v1074
        %v1079 = vmul.f32 %v1059, %v1075
        %v1080 = vmul.f32 %v1060, %v1076
        %v1081 = vmul.f32 %v1061, %v1077
        %v1082 = vmul.f32 %v1062, %v1078
        %v1083 = vadd.f32 %v1059, %v1060
        %v1084 = vrot.slane %v1083, 4
        %v1085 = vadd.f32 %v1083, %v1084
        %v1086 = vrot.slane %v1085, 2
        %v1087 = vadd.f32 %v1085, %v1086
        %v1088 = vrot.slane %v1087, 1
        %v1089 = vadd.f32 %v1087, %v1088
        %v1090 = vadd.f32 %v1061, %v1062
        %v1091 = vrot.slane %v1090, 4
        %v1092 = vadd.f32 %v1090, %v1091
        %v1093 = vrot.slane %v1092, 2
        %v1094 = vadd.f32 %v1092, %v1093
        %v1095 = vrot.slane %v1094, 1
        %v1096 = vadd.f32 %v1094, %v1095
        %v1097 = vadd.f32 %v1089, 1e-12
        %v1098 = vadd.f32 %v1096, 1e-12
        %v1099 = vrcp.pop %v1097
        %v1100 = vrcp.pop %v1098
        %v1101 = vmul.f32 %v1059, %v1099
        %v1102 = vmul.f32 %v1060, %v1099
        %v1103 = vmul.f32 %v1061, %v1100
        %v1104 = vmul.f32 %v1062, %v1100
        %1105 = vadd.xlane.f32.xlu0 %v1101
        %v1106 = vpop.xlane.xlu0 %1105
        %1107 = vadd.xlane.f32.xlu0 %v1102
        %v1108 = vpop.xlane.xlu0 %1107
        %1109 = vadd.xlane.f32.xlu0 %v1103
        %v1110 = vpop.xlane.xlu0 %1109
        %1111 = vadd.xlane.f32.xlu0 %v1104
        %v1112 = vpop.xlane.xlu0 %1111
        %v1113 = vrcp.pop %v1023
        %v1114 = vrcp.pop %v1024
        %v1115 = vperm.slane %v1113, 0
        %v1116 = vperm.slane %v1114, 0
        %v1117 = vmul.f32 %v1106, %v1115
        %v1118 = vmul.f32 %v1108, %v1115
        %v1119 = vmul.f32 %v1110, %v1116
        %v1120 = vmul.f32 %v1112, %v1116
        %v1121 = vmul.f32 %v1079, %v1117
        %v1122 = vmul.f32 %v1080, %v1118
        %v1123 = vmul.f32 %v1081, %v1119
        %v1124 = vmul.f32 %v1082, %v1120
        %v1125 = vadd.f32 %v1121, %v1122
        %v1126 = vrot.slane %v1125, 4
        %v1127 = vadd.f32 %v1125, %v1126
        %v1128 = vrot.slane %v1127, 2
        %v1129 = vadd.f32 %v1127, %v1128
        %v1130 = vrot.slane %v1129, 1
        %v1131 = vadd.f32 %v1129, %v1130
        %v1132 = vadd.f32 %v1123, %v1124
        %v1133 = vrot.slane %v1132, 4
        %v1134 = vadd.f32 %v1132, %v1133
        %v1135 = vrot.slane %v1134, 2
        %v1136 = vadd.f32 %v1134, %v1135
        %v1137 = vrot.slane %v1136, 1
        %v1138 = vadd.f32 %v1136, %v1137
        %1139 = vst [vmem:[%s414] sm:$0x1] %v1131
        %1140 = vst [vmem:[%s414 + $0x1] sm:$0x1] %v1138
        %v1141 = vld [vmem:[%s458] sm:$0xff]
        %v1142 = vld [vmem:[%s458 + $0x8] sm:$0xff]
        %v1143 = vld [vmem:[%s458 + $0x10] sm:$0xff]
        %v1144 = vld [vmem:[%s458 + $0x18] sm:$0xff]
        %v1145 = vld [vmem:[%s458 + $0x20] sm:$0xff]
        %v1146 = vld [vmem:[%s458 + $0x28] sm:$0xff]
        %v1147 = vld [vmem:[%s458 + $0x30] sm:$0xff]
        %v1148 = vld [vmem:[%s458 + $0x38] sm:$0xff]
        %v1149 = vld [vmem:[%s458 + $0x40] sm:$0xff]
        %v1150 = vld [vmem:[%s458 + $0x48] sm:$0xff]
        %v1151 = vld [vmem:[%s458 + $0x50] sm:$0xff]
        %v1152 = vld [vmem:[%s458 + $0x58] sm:$0xff]
        %v1153 = vld [vmem:[%s458 + $0x60] sm:$0xff]
        %v1154 = vld [vmem:[%s458 + $0x68] sm:$0xff]
        %v1155 = vld [vmem:[%s458 + $0x70] sm:$0xff]
        %v1156 = vld [vmem:[%s458 + $0x78] sm:$0xff]
        %v1157 = vld [vmem:[%s458 + $0x80] sm:$0xff]
        %v1158 = vld [vmem:[%s458 + $0x88] sm:$0xff]
        %v1159 = vld [vmem:[%s458 + $0x90] sm:$0xff]
        %v1160 = vld [vmem:[%s458 + $0x98] sm:$0xff]
        %v1161 = vld [vmem:[%s458 + $0xa0] sm:$0xff]
        %v1162 = vld [vmem:[%s458 + $0xa8] sm:$0xff]
        %v1163 = vld [vmem:[%s458 + $0xb0] sm:$0xff]
        %v1164 = vld [vmem:[%s458 + $0xb8] sm:$0xff]
        %v1165 = vld [vmem:[%s458 + $0xc0] sm:$0xff]
        %v1166 = vld [vmem:[%s458 + $0xc8] sm:$0xff]
        %v1167 = vld [vmem:[%s458 + $0xd0] sm:$0xff]
        %v1168 = vld [vmem:[%s458 + $0xd8] sm:$0xff]
        %v1169 = vld [vmem:[%s458 + $0xe0] sm:$0xff]
        %v1170 = vld [vmem:[%s458 + $0xe8] sm:$0xff]
        %v1171 = vld [vmem:[%s458 + $0xf0] sm:$0xff]
        %v1172 = vld [vmem:[%s458 + $0xf8] sm:$0xff]
        %v1173 = vld [vmem:[%s451] sm:$0x1]
        %v1174 = vld [vmem:[%s451 + $0x1] sm:$0x1]
        %1175 = vset.pattern.permute.xlu0 0
        %1176 = vperm.xlu0 %1175, %v1141
        %v1177 = vpop.permute.xlu0 %1176
        %1178 = vset.pattern.permute.xlu0 0
        %1179 = vperm.xlu0 %1178, %v1142
        %v1180 = vpop.permute.xlu0 %1179
        %1181 = vset.pattern.permute.xlu0 0
        %1182 = vperm.xlu0 %1181, %v1143
        %v1183 = vpop.permute.xlu0 %1182
        %1184 = vset.pattern.permute.xlu0 0
        %1185 = vperm.xlu0 %1184, %v1144
        %v1186 = vpop.permute.xlu0 %1185
        %1187 = vset.pattern.permute.xlu0 0
        %1188 = vperm.xlu0 %1187, %v1145
        %v1189 = vpop.permute.xlu0 %1188
        %1190 = vset.pattern.permute.xlu0 0
        %1191 = vperm.xlu0 %1190, %v1146
        %v1192 = vpop.permute.xlu0 %1191
        %1193 = vset.pattern.permute.xlu0 0
        %1194 = vperm.xlu0 %1193, %v1147
        %v1195 = vpop.permute.xlu0 %1194
        %1196 = vset.pattern.permute.xlu0 0
        %1197 = vperm.xlu0 %1196, %v1148
        %v1198 = vpop.permute.xlu0 %1197
        %1199 = vset.pattern.permute.xlu0 0
        %1200 = vperm.xlu0 %1199, %v1149
        %v1201 = vpop.permute.xlu0 %1200
        %1202 = vset.pattern.permute.xlu0 0
        %1203 = vperm.xlu0 %1202, %v1150
        %v1204 = vpop.permute.xlu0 %1203
        %1205 = vset.pattern.permute.xlu0 0
        %1206 = vperm.xlu0 %1205, %v1151
        %v1207 = vpop.permute.xlu0 %1206
        %1208 = vset.pattern.permute.xlu0 0
        %1209 = vperm.xlu0 %1208, %v1152
        %v1210 = vpop.permute.xlu0 %1209
        %1211 = vset.pattern.permute.xlu0 0
        %1212 = vperm.xlu0 %1211, %v1153
        %v1213 = vpop.permute.xlu0 %1212
        %1214 = vset.pattern.permute.xlu0 0
        %1215 = vperm.xlu0 %1214, %v1154
        %v1216 = vpop.permute.xlu0 %1215
        %1217 = vset.pattern.permute.xlu0 0
        %1218 = vperm.xlu0 %1217, %v1155
        %v1219 = vpop.permute.xlu0 %1218
        %1220 = vset.pattern.permute.xlu0 0
        %1221 = vperm.xlu0 %1220, %v1156
        %v1222 = vpop.permute.xlu0 %1221
        %1223 = vset.pattern.permute.xlu0 0
        %1224 = vperm.xlu0 %1223, %v1157
        %v1225 = vpop.permute.xlu0 %1224
        %1226 = vset.pattern.permute.xlu0 0
        %1227 = vperm.xlu0 %1226, %v1158
        %v1228 = vpop.permute.xlu0 %1227
        %1229 = vset.pattern.permute.xlu0 0
        %1230 = vperm.xlu0 %1229, %v1159
        %v1231 = vpop.permute.xlu0 %1230
        %1232 = vset.pattern.permute.xlu0 0
        %1233 = vperm.xlu0 %1232, %v1160
        %v1234 = vpop.permute.xlu0 %1233
        %1235 = vset.pattern.permute.xlu0 0
        %1236 = vperm.xlu0 %1235, %v1161
        %v1237 = vpop.permute.xlu0 %1236
        %1238 = vset.pattern.permute.xlu0 0
        %1239 = vperm.xlu0 %1238, %v1162
        %v1240 = vpop.permute.xlu0 %1239
        %1241 = vset.pattern.permute.xlu0 0
        %1242 = vperm.xlu0 %1241, %v1163
        %v1243 = vpop.permute.xlu0 %1242
        %1244 = vset.pattern.permute.xlu0 0
        %1245 = vperm.xlu0 %1244, %v1164
        %v1246 = vpop.permute.xlu0 %1245
        %1247 = vset.pattern.permute.xlu0 0
        %1248 = vperm.xlu0 %1247, %v1165
        %v1249 = vpop.permute.xlu0 %1248
        %1250 = vset.pattern.permute.xlu0 0
        %1251 = vperm.xlu0 %1250, %v1166
        %v1252 = vpop.permute.xlu0 %1251
        %1253 = vset.pattern.permute.xlu0 0
        %1254 = vperm.xlu0 %1253, %v1167
        %v1255 = vpop.permute.xlu0 %1254
        %1256 = vset.pattern.permute.xlu0 0
        %1257 = vperm.xlu0 %1256, %v1168
        %v1258 = vpop.permute.xlu0 %1257
        %1259 = vset.pattern.permute.xlu0 0
        %1260 = vperm.xlu0 %1259, %v1169
        %v1261 = vpop.permute.xlu0 %1260
        %1262 = vset.pattern.permute.xlu0 0
        %1263 = vperm.xlu0 %1262, %v1170
        %v1264 = vpop.permute.xlu0 %1263
        %1265 = vset.pattern.permute.xlu0 0
        %1266 = vperm.xlu0 %1265, %v1171
        %v1267 = vpop.permute.xlu0 %1266
        %1268 = vset.pattern.permute.xlu0 0
        %1269 = vperm.xlu0 %1268, %v1172
        %v1270 = vpop.permute.xlu0 %1269
        %v1271 = vperm.slane %v1173, 0
        %v1272 = vperm.slane %v1174, 0
        %vm1273 = vcmp.eq.s32.totalorder %v1177, %v1271
        %vm1274 = vcmp.eq.s32.totalorder %v1180, %v1271
        %vm1275 = vcmp.eq.s32.totalorder %v1183, %v1271
        %vm1276 = vcmp.eq.s32.totalorder %v1186, %v1271
        %vm1277 = vcmp.eq.s32.totalorder %v1189, %v1271
        %vm1278 = vcmp.eq.s32.totalorder %v1192, %v1271
        %vm1279 = vcmp.eq.s32.totalorder %v1195, %v1271
        %vm1280 = vcmp.eq.s32.totalorder %v1198, %v1271
        %vm1281 = vcmp.eq.s32.totalorder %v1201, %v1271
        %vm1282 = vcmp.eq.s32.totalorder %v1204, %v1271
        %vm1283 = vcmp.eq.s32.totalorder %v1207, %v1271
        %vm1284 = vcmp.eq.s32.totalorder %v1210, %v1271
        %vm1285 = vcmp.eq.s32.totalorder %v1213, %v1271
        %vm1286 = vcmp.eq.s32.totalorder %v1216, %v1271
        %vm1287 = vcmp.eq.s32.totalorder %v1219, %v1271
        %vm1288 = vcmp.eq.s32.totalorder %v1222, %v1271
        %vm1289 = vcmp.eq.s32.totalorder %v1225, %v1272
        %vm1290 = vcmp.eq.s32.totalorder %v1228, %v1272
        %vm1291 = vcmp.eq.s32.totalorder %v1231, %v1272
        %vm1292 = vcmp.eq.s32.totalorder %v1234, %v1272
        %vm1293 = vcmp.eq.s32.totalorder %v1237, %v1272
        %vm1294 = vcmp.eq.s32.totalorder %v1240, %v1272
        %vm1295 = vcmp.eq.s32.totalorder %v1243, %v1272
        %vm1296 = vcmp.eq.s32.totalorder %v1246, %v1272
        %vm1297 = vcmp.eq.s32.totalorder %v1249, %v1272
        %vm1298 = vcmp.eq.s32.totalorder %v1252, %v1272
        %vm1299 = vcmp.eq.s32.totalorder %v1255, %v1272
        %vm1300 = vcmp.eq.s32.totalorder %v1258, %v1272
        %vm1301 = vcmp.eq.s32.totalorder %v1261, %v1272
        %vm1302 = vcmp.eq.s32.totalorder %v1264, %v1272
        %vm1303 = vcmp.eq.s32.totalorder %v1267, %v1272
        %vm1304 = vcmp.eq.s32.totalorder %v1270, %v1272
        %v1305 = vsel %vm1273, 1.0, 0.0
        %v1306 = vsel %vm1274, 1.0, 0.0
        %v1307 = vsel %vm1275, 1.0, 0.0
        %v1308 = vsel %vm1276, 1.0, 0.0
        %v1309 = vsel %vm1277, 1.0, 0.0
        %v1310 = vsel %vm1278, 1.0, 0.0
        %v1311 = vsel %vm1279, 1.0, 0.0
        %v1312 = vsel %vm1280, 1.0, 0.0
        %v1313 = vsel %vm1281, 1.0, 0.0
        %v1314 = vsel %vm1282, 1.0, 0.0
        %v1315 = vsel %vm1283, 1.0, 0.0
        %v1316 = vsel %vm1284, 1.0, 0.0
        %v1317 = vsel %vm1285, 1.0, 0.0
        %v1318 = vsel %vm1286, 1.0, 0.0
        %v1319 = vsel %vm1287, 1.0, 0.0
        %v1320 = vsel %vm1288, 1.0, 0.0
        %v1321 = vsel %vm1289, 1.0, 0.0
        %v1322 = vsel %vm1290, 1.0, 0.0
        %v1323 = vsel %vm1291, 1.0, 0.0
        %v1324 = vsel %vm1292, 1.0, 0.0
        %v1325 = vsel %vm1293, 1.0, 0.0
        %v1326 = vsel %vm1294, 1.0, 0.0
        %v1327 = vsel %vm1295, 1.0, 0.0
        %v1328 = vsel %vm1296, 1.0, 0.0
        %v1329 = vsel %vm1297, 1.0, 0.0
        %v1330 = vsel %vm1298, 1.0, 0.0
        %v1331 = vsel %vm1299, 1.0, 0.0
        %v1332 = vsel %vm1300, 1.0, 0.0
        %v1333 = vsel %vm1301, 1.0, 0.0
        %v1334 = vsel %vm1302, 1.0, 0.0
        %v1335 = vsel %vm1303, 1.0, 0.0
        %v1336 = vsel %vm1304, 1.0, 0.0
        %v1337 = vpack.c.bf16 %v1305, %v1305
        %v1338 = vpack.c.bf16 %v1306, %v1306
        %v1339 = vpack.c.bf16 %v1307, %v1307
        %v1340 = vpack.c.bf16 %v1308, %v1308
        %v1341 = vpack.c.bf16 %v1309, %v1309
        %v1342 = vpack.c.bf16 %v1310, %v1310
        %v1343 = vpack.c.bf16 %v1311, %v1311
        %v1344 = vpack.c.bf16 %v1312, %v1312
        %v1345 = vpack.c.bf16 %v1313, %v1313
        %v1346 = vpack.c.bf16 %v1314, %v1314
        %v1347 = vpack.c.bf16 %v1315, %v1315
        %v1348 = vpack.c.bf16 %v1316, %v1316
        %v1349 = vpack.c.bf16 %v1317, %v1317
        %v1350 = vpack.c.bf16 %v1318, %v1318
        %v1351 = vpack.c.bf16 %v1319, %v1319
        %v1352 = vpack.c.bf16 %v1320, %v1320
        %v1353 = vpack.c.bf16 %v1321, %v1321
        %v1354 = vpack.c.bf16 %v1322, %v1322
        %v1355 = vpack.c.bf16 %v1323, %v1323
        %v1356 = vpack.c.bf16 %v1324, %v1324
        %v1357 = vpack.c.bf16 %v1325, %v1325
        %v1358 = vpack.c.bf16 %v1326, %v1326
        %v1359 = vpack.c.bf16 %v1327, %v1327
        %v1360 = vpack.c.bf16 %v1328, %v1328
        %v1361 = vpack.c.bf16 %v1329, %v1329
        %v1362 = vpack.c.bf16 %v1330, %v1330
        %v1363 = vpack.c.bf16 %v1331, %v1331
        %v1364 = vpack.c.bf16 %v1332, %v1332
        %v1365 = vpack.c.bf16 %v1333, %v1333
        %v1366 = vpack.c.bf16 %v1334, %v1334
        %v1367 = vpack.c.bf16 %v1335, %v1335
        %v1368 = vpack.c.bf16 %v1336, %v1336
        %v1369 = vpack.c.bf16 %v1131, %v1131
        %v1370 = vpack.c.bf16 %v1138, %v1138
        %v1387 = vunpack.c.l.b16 %v1337
        %v1388 = vunpack.c.l.b16 %v1338
        %v1389 = vunpack.c.l.b16 %v1339
        %v1390 = vunpack.c.l.b16 %v1340
        %v1391 = vunpack.c.l.b16 %v1341
        %v1392 = vunpack.c.l.b16 %v1342
        %v1393 = vunpack.c.l.b16 %v1343
        %v1394 = vunpack.c.l.b16 %v1344
        %v1395 = vunpack.c.l.b16 %v1345
        %v1396 = vunpack.c.l.b16 %v1346
        %v1397 = vunpack.c.l.b16 %v1347
        %v1398 = vunpack.c.l.b16 %v1348
        %v1399 = vunpack.c.l.b16 %v1349
        %v1400 = vunpack.c.l.b16 %v1350
        %v1401 = vunpack.c.l.b16 %v1351
        %v1402 = vunpack.c.l.b16 %v1352
        %v1403 = vpack.c.b16 %v1388, %v1387
        %v1404 = vpack.c.b16 %v1390, %v1389
        %v1405 = vpack.c.b16 %v1392, %v1391
        %v1406 = vpack.c.b16 %v1394, %v1393
        %v1407 = vpack.c.b16 %v1396, %v1395
        %v1408 = vpack.c.b16 %v1398, %v1397
        %v1409 = vpack.c.b16 %v1400, %v1399
        %v1410 = vpack.c.b16 %v1402, %v1401
        %1419 = vmatpush.bf16.xpose.msra.mxu0 %v1410
        %1420 = vmatpush.bf16.xpose.msra.mxu0 %v1409
        %1421 = vmatpush.bf16.xpose.msra.mxu0 %v1408
        %1422 = vmatpush.bf16.xpose.msra.mxu0 %v1407
        %1423 = vmatpush.bf16.xpose.msra.mxu0 %v1406
        %1424 = vmatpush.bf16.xpose.msra.mxu0 %v1405
        %1425 = vmatpush.bf16.xpose.msra.mxu0 %v1404
        %1426 = vmatpush.bf16.xpose.msra.mxu0 %v1403
        %1427 = vmatmul.bf16.gmra.mxu0 %v1369
        %v1428 = vpop.f32.mrf.mxu0
        %v1429 = vadd.f32 0.0, %v1428
        %v1430 = vpop.f32.mrf.mxu0
        %1431 = vdwg.mxu0
        %v1448 = vunpack.c.l.b16 %v1353
        %v1449 = vunpack.c.l.b16 %v1354
        %v1450 = vunpack.c.l.b16 %v1355
        %v1451 = vunpack.c.l.b16 %v1356
        %v1452 = vunpack.c.l.b16 %v1357
        %v1453 = vunpack.c.l.b16 %v1358
        %v1454 = vunpack.c.l.b16 %v1359
        %v1455 = vunpack.c.l.b16 %v1360
        %v1456 = vunpack.c.l.b16 %v1361
        %v1457 = vunpack.c.l.b16 %v1362
        %v1458 = vunpack.c.l.b16 %v1363
        %v1459 = vunpack.c.l.b16 %v1364
        %v1460 = vunpack.c.l.b16 %v1365
        %v1461 = vunpack.c.l.b16 %v1366
        %v1462 = vunpack.c.l.b16 %v1367
        %v1463 = vunpack.c.l.b16 %v1368
        %v1464 = vpack.c.b16 %v1449, %v1448
        %v1465 = vpack.c.b16 %v1451, %v1450
        %v1466 = vpack.c.b16 %v1453, %v1452
        %v1467 = vpack.c.b16 %v1455, %v1454
        %v1468 = vpack.c.b16 %v1457, %v1456
        %v1469 = vpack.c.b16 %v1459, %v1458
        %v1470 = vpack.c.b16 %v1461, %v1460
        %v1471 = vpack.c.b16 %v1463, %v1462
        %1480 = vmatpush.bf16.xpose.msra.mxu0 %v1471
        %1481 = vmatpush.bf16.xpose.msra.mxu0 %v1470
        %1482 = vmatpush.bf16.xpose.msra.mxu0 %v1469
        %1483 = vmatpush.bf16.xpose.msra.mxu0 %v1468
        %1484 = vmatpush.bf16.xpose.msra.mxu0 %v1467
        %1485 = vmatpush.bf16.xpose.msra.mxu0 %v1466
        %1486 = vmatpush.bf16.xpose.msra.mxu0 %v1465
        %1487 = vmatpush.bf16.xpose.msra.mxu0 %v1464
        %1488 = vmatmul.bf16.gmra.mxu0 %v1370
        %v1489 = vpop.f32.mrf.mxu0
        %v1490 = vadd.f32 0.0, %v1489
        %v1491 = vpop.f32.mrf.mxu0
        %1492 = vdwg.mxu0
        %1493 = vst [vmem:[%s421] sm:$0x1] %v1429
        %1494 = vst [vmem:[%s421 + $0x1] sm:$0x1] %v1490
        %s1495 = sand.u32 %s233, 1
        %s1496 = scalar_lea.sflag [#allocation3], %s1495
        %s1497 = sand.u32 %s233, 1
        %s1498 = smul.addr %s1497, 2
        %s1499 = scalar_lea.vmem [#allocation2], %s1498
        %s1500 = sand.u32 %s259, 1
        %s1501 = scalar_lea.sflag [#allocation5], %s1500
        %s1502 = sand.u32 %s259, 1
        %s1503 = smul.addr %s1502, 2
        %s1504 = scalar_lea.vmem [#allocation4], %s1503
        // Predicated region
        $region53: #{tpu_custom_call.1} parent=51 // pred_check
          %p1505 = pneg %p243
        $region54: #{tpu_custom_call.1} parent=51 // pred_check_branch
          %1507 = sbr.rel (%p1505) target = $region56
        $region55: #{tpu_custom_call.1} parent=51 // pred_region
          %s1508 = smul.u32 2, %s27
          %1510 = vsyncadd %s1496, 0
          %s1511 = scalar_lea.hbm %s8, %s1508
          %s1512 = sshll.u32 %s1499, 4
          %s1513 = int_to_ptr.vmem [resolvable:$true] %s1512
          %s1514 = sshll.u32 %s1511, 4
          %s1515 = int_to_ptr.hbm [resolvable:$true] %s1514
          %1520 = dma.vmem_to_hbm [thread:$0]  %s1513, 32, %s1515, %s1496, 16, 16, 1
        $region56: #{tpu_custom_call.1} parent=51 // pred_fallthru
          _
        // Predicated region
        $region57: #{tpu_custom_call.1} parent=51 // pred_check
          %p1521 = pneg %p269
        $region58: #{tpu_custom_call.1} parent=51 // pred_check_branch
          %1523 = sbr.rel (%p1521) target = $region60
        $region59: #{tpu_custom_call.1} parent=51 // pred_region
          %s1524 = smul.u32 2, %s27
          %1526 = vsyncadd %s1501, 0
          %s1527 = scalar_lea.hbm %s9, %s1524
          %s1528 = sshll.u32 %s1504, 4
          %s1529 = int_to_ptr.vmem [resolvable:$true] %s1528
          %s1530 = sshll.u32 %s1527, 4
          %s1531 = int_to_ptr.hbm [resolvable:$true] %s1530
          %1536 = dma.vmem_to_hbm [thread:$0]  %s1529, 32, %s1531, %s1501, 16, 16, 1
        $region60: #{tpu_custom_call.1} parent=51 // pred_fallthru
          _
      $region52: #{tpu_custom_call.1} parent=5 // pred_fallthru
        _
      %p1537 = scmp.le.s32.totalorder 2, %s22
      // Predicated region
      $region61: #{tpu_custom_call.1} parent=5 // pred_check
        %p1538 = pneg %p1537
      $region62: #{tpu_custom_call.1} parent=5 // pred_check_branch
        %1540 = sbr.rel (%p1538) target = $region64
      $region63: #{tpu_custom_call.1} parent=5 // pred_region
        %s1541 = ssub.s32 %s22, 2
        // Predicated region
        $region65: #{tpu_custom_call.1} parent=63 // pred_check
          %p1542 = pneg %p249
        $region66: #{tpu_custom_call.1} parent=63 // pred_check_branch
          %1544 = sbr.rel (%p1542) target = $region68
        $region67: #{tpu_custom_call.1} parent=63 // pred_region
          %s1545 = sand.u32 %s234, 1
          %s1546 = scalar_lea.sflag [#allocation3], %s1545
          %s1547 = sand.u32 %s234, 1
          %s1548 = smul.addr %s1547, 2
          %s1549 = scalar_lea.vmem [#allocation2], %s1548
          %1551 = dma.done %s1546, 32
        $region68: #{tpu_custom_call.1} parent=63 // pred_fallthru
          _
        // Predicated region
        $region69: #{tpu_custom_call.1} parent=63 // pred_check
          %p1552 = pneg %p275
        $region70: #{tpu_custom_call.1} parent=63 // pred_check_branch
          %1554 = sbr.rel (%p1552) target = $region72
        $region71: #{tpu_custom_call.1} parent=63 // pred_region
          %s1555 = sand.u32 %s260, 1
          %s1556 = scalar_lea.sflag [#allocation5], %s1555
          %s1557 = sand.u32 %s260, 1
          %s1558 = smul.addr %s1557, 2
          %s1559 = scalar_lea.vmem [#allocation4], %s1558
          %1561 = dma.done %s1556, 32
        $region72: #{tpu_custom_call.1} parent=63 // pred_fallthru
          _
      $region64: #{tpu_custom_call.1} parent=5 // pred_fallthru
        _
    $region6: #{tpu_custom_call.1} parent=1 // loop_footer
      %s26 = sadd.s32 1, %s22
    $region7: #{tpu_custom_call.1} parent=1 // loop_footer_branch
      %21 = sbr.rel target = $region3
    $region8: #{tpu_custom_call.1} parent=1 // loop_exit
      _
    %1562 = vsyncpa [#allocation3], 1
    %s1563 = scalar_lea.sflag [#allocation3], 1
    %1564 = vsyncpa %s1563, 1
    %1565 = vsyncpa [#allocation5], 1
    %s1566 = scalar_lea.sflag [#allocation5], 1
    %1567 = vsyncpa %s1566, 1

</llo_original>
